<compile_context>
chip_gen: v7x
topology: tpu7x:2x2x1
jax: 0.10.0
libtpu: 0.0.40
codegen_flags: <defaults>
</compile_context>

<pallas_src>
import functools

import jax
import jax.numpy as jnp
from jax.experimental import pallas as pl
from jax.experimental.pallas import tpu as pltpu


_MAX_TILE_ROWS = 2048
_TILE_VMEM_BUDGET = 24 * 1024 * 1024   # bytes for double-buffered x + out row tiles
_VMEM_LIMIT_BYTES = 48 * 1024 * 1024   # scoped VMEM: fits v7x (64 MiB) and v5e/v6e


def _round_up(v, m):
    return ((v + m - 1) // m) * m


def _pick_tile_rows(n, d, itemsize):
    """Largest row tile (multiple of 128) whose streamed buffers fit the budget."""
    per_row = 4 * d * itemsize            # double-buffered input + double-buffered output
    cap = max(128, (_TILE_VMEM_BUDGET // max(per_row, 1)) // 128 * 128)
    tn = min(_MAX_TILE_ROWS, cap, _round_up(max(n, 1), 128))
    return max(tn, 128)


def _stats_kernel(x_ref, c_ref, mean_ref, cov_ref, *, n_rows, block_rows):
    """Accumulate sum(y) and y^T y (y = x - c) into the resident output blocks."""
    i = pl.program_id(0)

    @pl.when(i == 0)
    def _init():
        mean_ref[...] = jnp.zeros_like(mean_ref)
        cov_ref[...] = jnp.zeros_like(cov_ref)

    c = c_ref[...]                                             # (1, D) f32 shift row
    y = x_ref[...].astype(jnp.float32) - c                     # (tn, D)
    if n_rows % block_rows != 0:                               # static: mask ragged tail
        row = jax.lax.broadcasted_iota(jnp.int32, y.shape, 0) + i * block_rows
        y = jnp.where(row < n_rows, y, jnp.float32(0.0))

    mean_ref[...] += jnp.sum(y, axis=0, keepdims=True)         # (1, D)
    # y^T y without materializing an explicit transpose (contract over rows).
    cov_ref[...] += jax.lax.dot_general(
        y, y, dimension_numbers=(((0,), (0,)), ((), ())),
        preferred_element_type=jnp.float32)                    # (D, D)

    @pl.when(i == pl.num_programs(0) - 1)
    def _finalize():
        inv_n = jnp.float32(1.0 / n_rows)
        mean_y = mean_ref[...] * inv_n                         # (1, D)
        outer = jax.lax.dot_general(
            mean_y, mean_y, dimension_numbers=(((0,), (0,)), ((), ())),
            preferred_element_type=jnp.float32)                # (D, D)
        cov_ref[...] = cov_ref[...] * inv_n - outer            # cov(x) == cov(y)
        mean_ref[...] = mean_y + c                             # mean(x)


def _project_kernel(x_ref, mean_ref, w_ref, out_ref):
    """out = (x - mean) @ W, with W = u * rsqrt(s + 1e-5) precomputed in the wrapper."""
    xc = x_ref[...].astype(jnp.float32) - mean_ref[...]
    out_ref[...] = jnp.dot(xc, w_ref[...],
                           preferred_element_type=jnp.float32).astype(out_ref.dtype)


@functools.partial(jax.jit, static_argnames=("num_pcs",))
def whitening(x, num_pcs=None):
    if x.dtype not in (jnp.float32, jnp.bfloat16):
        x = x.astype(jnp.float32)
    n, d = x.shape
    if num_pcs is not None and num_pcs != d:
        # In the reference module the division x_rot / sqrt(s + 1e-5) only
        # broadcasts when num_pcs == d (or None), so that is all we support.
        raise ValueError(f"num_pcs must be None or equal to the feature dim ({d}).")

    tn = _pick_tile_rows(n, d, jnp.dtype(x.dtype).itemsize)
    grid = (pl.cdiv(n, tn),)

    # Representative row as a shift: cov(x) == cov(x - c), greatly reduces the
    # one-pass E[yy^T] - mu mu^T cancellation when the data mean is large.
    shift = x[:1].astype(jnp.float32)                          # (1, D)

    # ---- pass 1: mean + covariance, streamed row tiles, VMEM-resident accumulators ----
    mean, cov = pl.pallas_call(
        functools.partial(_stats_kernel, n_rows=n, block_rows=tn),
        grid=grid,
        in_specs=[pl.BlockSpec((tn, d), lambda i: (i, 0)),
                  pl.BlockSpec((1, d), lambda i: (0, 0))],
        out_specs=(pl.BlockSpec((1, d), lambda i: (0, 0)),
                   pl.BlockSpec((d, d), lambda i: (0, 0))),
        out_shape=(jax.ShapeDtypeStruct((1, d), jnp.float32),
                   jax.ShapeDtypeStruct((d, d), jnp.float32)),
        compiler_params=pltpu.CompilerParams(
            dimension_semantics=("arbitrary",),
            vmem_limit_bytes=_VMEM_LIMIT_BYTES),
    )(x, shift)

    # ---- eigendecomposition of the tiny (D, D) symmetric PSD covariance ----
    # TODO(synk): torch.svd has no Pallas TPU equivalent; the (D, D) symmetric eig
    # is done with jnp.linalg.eigh between the two Pallas passes.
    evals, evecs = jnp.linalg.eigh(cov)
    s = jnp.maximum(evals[::-1], 0.0)                          # descending, like torch.svd of PSD
    u = evecs[:, ::-1]
    w = (u * jax.lax.rsqrt(s + jnp.float32(1e-5))).astype(jnp.float32)   # (D, D)

    # ---- pass 2: whitened projection, row-parallel streaming tiles ----
    out = pl.pallas_call(
        _project_kernel,
        grid=grid,
        in_specs=[pl.BlockSpec((tn, d), lambda i: (i, 0)),
                  pl.BlockSpec((1, d), lambda i: (0, 0)),
                  pl.BlockSpec((d, d), lambda i: (0, 0))],
        out_specs=pl.BlockSpec((tn, d), lambda i: (i, 0)),
        out_shape=jax.ShapeDtypeStruct((n, d), x.dtype),
        compiler_params=pltpu.CompilerParams(
            dimension_semantics=("parallel",),
            vmem_limit_bytes=_VMEM_LIMIT_BYTES),
    )(x, mean, w)
    return out


class Whitening:
    """JAX/Pallas port of the PyTorch Whitening module."""

    def __init__(self, num_pcs=None):
        self.num_pcs = num_pcs

    def __call__(self, x):
        return whitening(x, num_pcs=self.num_pcs)


def _check(xw, n, d):
    assert xw.shape == (n, d)
    assert bool(jnp.isfinite(xw).all()), "non-finite output"
    xw32 = xw.astype(jnp.float32)
    max_mean = float(jnp.abs(jnp.mean(xw32, axis=0)).max())
    cov_w = xw32.T @ xw32 / n
    max_dev = float(jnp.abs(cov_w - jnp.eye(d, dtype=jnp.float32)).max())
    assert max_mean < 1e-3, f"whitened mean not ~0 ({max_mean})"
    assert max_dev < 5e-2, f"whitened covariance not ~I ({max_dev})"


if __name__ == "__main__":
    key = jax.random.PRNGKey(0)
    mod = Whitening()            # num_pcs=None -> full-rank PCA whitening

    # Exact-tile case.
    n, d = 256, 32
    x = jax.random.normal(key, (n, d), jnp.float32) * 1.5 + 0.7
    xw = mod(x)
    jax.block_until_ready(xw)
    _check(xw, n, d)

    # Ragged case (row count not a multiple of the tile) exercises the in-kernel mask.
    n2 = 300
    x2 = jax.random.normal(jax.random.PRNGKey(1), (n2, d), jnp.float32) * 0.8 - 1.3
    xw2 = mod(x2)
    jax.block_until_ready(xw2)
    _check(xw2, n2, d)

    print("KERNEL_OK")
</pallas_src>

<mosaic_0001>
module attributes {stable_mosaic.version = 11 : i64} {
  func.func @_stats_kernel(%arg0: i32, %arg1: memref<256x32xf32, #tpu.memory_space<vmem>>, %arg2: memref<1x32xf32, #tpu.memory_space<vmem>>, %arg3: memref<1x32xf32, #tpu.memory_space<vmem>>, %arg4: memref<32x32xf32, #tpu.memory_space<vmem>>) attributes {dimension_semantics = [#tpu.dimension_semantics<arbitrary>], iteration_bounds = array<i64: 1>, scalar_prefetch = 0 : i64, scratch_operands = 0 : i64, tpu.core_type = #tpu.core_type<tc>, window_params = [{transform_indices = @transform_0, window_bounds = array<i64: 256, 32>}, {pipeline_mode = #tpu.pipeline_mode<synchronous>, transform_indices = @transform_1, window_bounds = array<i64: 1, 32>}, {pipeline_mode = #tpu.pipeline_mode<synchronous>, transform_indices = @transform_2, window_bounds = array<i64: 1, 32>}, {pipeline_mode = #tpu.pipeline_mode<synchronous>, transform_indices = @transform_3, window_bounds = array<i64: 32, 32>}]} {
    %c0_i32 = arith.constant 0 : i32
    %0 = arith.cmpi eq, %arg0, %c0_i32 : i32
    %1 = arith.extui %0 : i1 to i32
    %c0_i32_0 = arith.constant 0 : i32
    %2 = arith.cmpi ne, %1, %c0_i32_0 : i32
    scf.if %2 {
      %cst_15 = arith.constant 0.000000e+00 : f32
      %19 = vector.broadcast %cst_15 : f32 to vector<1x32xf32>
      %c0_16 = arith.constant 0 : index
      %c0_17 = arith.constant 0 : index
      %20 = vector.load %arg3[%c0_16, %c0_17] : memref<1x32xf32, #tpu.memory_space<vmem>>, vector<1x32xf32>
      tpu.vector_store %arg3[%c0_16, %c0_17], %19 {strides = array<i32>} : memref<1x32xf32, #tpu.memory_space<vmem>>, vector<1x32xf32>,
      %cst_18 = arith.constant 0.000000e+00 : f32
      %21 = vector.broadcast %cst_18 : f32 to vector<32x32xf32>
      %c0_19 = arith.constant 0 : index
      %c0_20 = arith.constant 0 : index
      %22 = vector.load %arg4[%c0_19, %c0_20] : memref<32x32xf32, #tpu.memory_space<vmem>>, vector<32x32xf32>
      tpu.vector_store %arg4[%c0_19, %c0_20], %21 {strides = array<i32>} : memref<32x32xf32, #tpu.memory_space<vmem>>, vector<32x32xf32>,
    } else {
    }
    %c0 = arith.constant 0 : index
    %c0_1 = arith.constant 0 : index
    %3 = vector.load %arg2[%c0, %c0_1] : memref<1x32xf32, #tpu.memory_space<vmem>>, vector<1x32xf32>
    %c0_2 = arith.constant 0 : index
    %c0_3 = arith.constant 0 : index
    %4 = vector.load %arg1[%c0_2, %c0_3] : memref<256x32xf32, #tpu.memory_space<vmem>>, vector<256x32xf32>
    %5 = vector.broadcast %3 : vector<1x32xf32> to vector<256x32xf32>
    %6 = arith.subf %4, %5 : vector<256x32xf32>
    %c0_4 = arith.constant 0 : index
    %c0_5 = arith.constant 0 : index
    %7 = vector.load %arg3[%c0_4, %c0_5] : memref<1x32xf32, #tpu.memory_space<vmem>>, vector<1x32xf32>
    %cst = arith.constant dense<0.000000e+00> : vector<32xf32>
    %8 = vector.multi_reduction <add>, %6, %cst [0] : vector<256x32xf32> to vector<32xf32>
    %9 = vector.shape_cast %8 : vector<32xf32> to vector<1x32xf32>
    %10 = arith.addf %7, %9 : vector<1x32xf32>
    %c0_6 = arith.constant 0 : index
    %c0_7 = arith.constant 0 : index
    %11 = vector.load %arg3[%c0_6, %c0_7] : memref<1x32xf32, #tpu.memory_space<vmem>>, vector<1x32xf32>
    tpu.vector_store %arg3[%c0_6, %c0_7], %10 {strides = array<i32>} : memref<1x32xf32, #tpu.memory_space<vmem>>, vector<1x32xf32>,
    %c0_8 = arith.constant 0 : index
    %c0_9 = arith.constant 0 : index
    %12 = vector.load %arg4[%c0_8, %c0_9] : memref<32x32xf32, #tpu.memory_space<vmem>>, vector<32x32xf32>
    %cst_10 = arith.constant dense<0.000000e+00> : vector<32x32xf32>
    %13 = tpu.matmul %6, %6, %cst_10 {dimension_numbers = #tpu.dot_dimension_numbers<[0], [0], [1], [1], [0, 1, 1, 1], [], []>} : vector<256x32xf32>, vector<256x32xf32>, vector<32x32xf32> -> vector<32x32xf32>
    %14 = arith.addf %12, %13 : vector<32x32xf32>
    %c0_11 = arith.constant 0 : index
    %c0_12 = arith.constant 0 : index
    %15 = vector.load %arg4[%c0_11, %c0_12] : memref<32x32xf32, #tpu.memory_space<vmem>>, vector<32x32xf32>
    tpu.vector_store %arg4[%c0_11, %c0_12], %14 {strides = array<i32>} : memref<32x32xf32, #tpu.memory_space<vmem>>, vector<32x32xf32>,
    %c0_i32_13 = arith.constant 0 : i32
    %16 = arith.cmpi eq, %arg0, %c0_i32_13 : i32
    %17 = arith.extui %16 : i1 to i32
    %c0_i32_14 = arith.constant 0 : i32
    %18 = arith.cmpi ne, %17, %c0_i32_14 : i32
    scf.if %18 {
      %c0_15 = arith.constant 0 : index
      %c0_16 = arith.constant 0 : index
      %19 = vector.load %arg3[%c0_15, %c0_16] : memref<1x32xf32, #tpu.memory_space<vmem>>, vector<1x32xf32>
      %cst_17 = arith.constant 3.906250e-03 : f32
      %20 = vector.broadcast %cst_17 : f32 to vector<1x32xf32>
      %21 = arith.mulf %19, %20 : vector<1x32xf32>
      %cst_18 = arith.constant dense<0.000000e+00> : vector<32x32xf32>
      %22 = tpu.matmul %21, %21, %cst_18 {dimension_numbers = #tpu.dot_dimension_numbers<[0], [0], [1], [1], [0, 1, 1, 1], [], []>} : vector<1x32xf32>, vector<1x32xf32>, vector<32x32xf32> -> vector<32x32xf32>
      %c0_19 = arith.constant 0 : index
      %c0_20 = arith.constant 0 : index
      %23 = vector.load %arg4[%c0_19, %c0_20] : memref<32x32xf32, #tpu.memory_space<vmem>>, vector<32x32xf32>
      %cst_21 = arith.constant 3.906250e-03 : f32
      %24 = vector.broadcast %cst_21 : f32 to vector<32x32xf32>
      %25 = arith.mulf %23, %24 : vector<32x32xf32>
      %26 = arith.subf %25, %22 : vector<32x32xf32>
      %c0_22 = arith.constant 0 : index
      %c0_23 = arith.constant 0 : index
      %27 = vector.load %arg4[%c0_22, %c0_23] : memref<32x32xf32, #tpu.memory_space<vmem>>, vector<32x32xf32>
      tpu.vector_store %arg4[%c0_22, %c0_23], %26 {strides = array<i32>} : memref<32x32xf32, #tpu.memory_space<vmem>>, vector<32x32xf32>,
      %28 = arith.addf %21, %3 : vector<1x32xf32>
      %c0_24 = arith.constant 0 : index
      %c0_25 = arith.constant 0 : index
      %29 = vector.load %arg3[%c0_24, %c0_25] : memref<1x32xf32, #tpu.memory_space<vmem>>, vector<1x32xf32>
      tpu.vector_store %arg3[%c0_24, %c0_25], %28 {strides = array<i32>} : memref<1x32xf32, #tpu.memory_space<vmem>>, vector<1x32xf32>,
    } else {
    }
    return
  }
  func.func @transform_0(%arg0: i32) -> (i32, i32) {
    %c0_i32 = arith.constant 0 : i32
    %c0_i32_0 = arith.constant 0 : i32
    return %arg0, %c0_i32 : i32, i32
  }
  func.func @transform_1(%arg0: i32) -> (i32, i32) {
    %c0_i32 = arith.constant 0 : i32
    %c0_i32_0 = arith.constant 0 : i32
    %c0_i32_1 = arith.constant 0 : i32
    return %c0_i32, %c0_i32_0 : i32, i32
  }
  func.func @transform_2(%arg0: i32) -> (i32, i32) {
    %c0_i32 = arith.constant 0 : i32
    %c0_i32_0 = arith.constant 0 : i32
    %c0_i32_1 = arith.constant 0 : i32
    return %c0_i32, %c0_i32_0 : i32, i32
  }
  func.func @transform_3(%arg0: i32) -> (i32, i32) {
    %c0_i32 = arith.constant 0 : i32
    %c0_i32_0 = arith.constant 0 : i32
    %c0_i32_1 = arith.constant 0 : i32
    return %c0_i32, %c0_i32_0 : i32, i32
  }
}

module attributes {stable_mosaic.version = 11 : i64} {
  func.func @_project_kernel(%arg0: i32, %arg1: memref<256x32xf32, #tpu.memory_space<vmem>>, %arg2: memref<1x32xf32, #tpu.memory_space<vmem>>, %arg3: memref<32x32xf32, #tpu.memory_space<vmem>>, %arg4: memref<256x32xf32, #tpu.memory_space<vmem>>) attributes {dimension_semantics = [#tpu.dimension_semantics<parallel>], iteration_bounds = array<i64: 1>, scalar_prefetch = 0 : i64, scratch_operands = 0 : i64, tpu.core_type = #tpu.core_type<tc>, window_params = [{transform_indices = @transform_0, window_bounds = array<i64: 256, 32>}, {pipeline_mode = #tpu.pipeline_mode<synchronous>, transform_indices = @transform_1, window_bounds = array<i64: 1, 32>}, {pipeline_mode = #tpu.pipeline_mode<synchronous>, transform_indices = @transform_2, window_bounds = array<i64: 32, 32>}, {transform_indices = @transform_3, window_bounds = array<i64: 256, 32>}]} {
    %c0 = arith.constant 0 : index
    %c0_0 = arith.constant 0 : index
    %0 = vector.load %arg1[%c0, %c0_0] : memref<256x32xf32, #tpu.memory_space<vmem>>, vector<256x32xf32>
    %c0_1 = arith.constant 0 : index
    %c0_2 = arith.constant 0 : index
    %1 = vector.load %arg2[%c0_1, %c0_2] : memref<1x32xf32, #tpu.memory_space<vmem>>, vector<1x32xf32>
    %2 = vector.broadcast %1 : vector<1x32xf32> to vector<256x32xf32>
    %3 = arith.subf %0, %2 : vector<256x32xf32>
    %c0_3 = arith.constant 0 : index
    %c0_4 = arith.constant 0 : index
    %4 = vector.load %arg3[%c0_3, %c0_4] : memref<32x32xf32, #tpu.memory_space<vmem>>, vector<32x32xf32>
    %cst = arith.constant dense<0.000000e+00> : vector<256x32xf32>
    %5 = tpu.matmul %3, %4, %cst {dimension_numbers = #tpu.dot_dimension_numbers<[1], [0], [0], [1], [0, 0, 1, 1], [], []>} : vector<256x32xf32>, vector<32x32xf32>, vector<256x32xf32> -> vector<256x32xf32>
    %c0_5 = arith.constant 0 : index
    %c0_6 = arith.constant 0 : index
    %6 = vector.load %arg4[%c0_5, %c0_6] : memref<256x32xf32, #tpu.memory_space<vmem>>, vector<256x32xf32>
    tpu.vector_store %arg4[%c0_5, %c0_6], %5 {strides = array<i32>} : memref<256x32xf32, #tpu.memory_space<vmem>>, vector<256x32xf32>,
    return
  }
  func.func @transform_0(%arg0: i32) -> (i32, i32) {
    %c0_i32 = arith.constant 0 : i32
    %c0_i32_0 = arith.constant 0 : i32
    return %arg0, %c0_i32 : i32, i32
  }
  func.func @transform_1(%arg0: i32) -> (i32, i32) {
    %c0_i32 = arith.constant 0 : i32
    %c0_i32_0 = arith.constant 0 : i32
    %c0_i32_1 = arith.constant 0 : i32
    return %c0_i32, %c0_i32_0 : i32, i32
  }
  func.func @transform_2(%arg0: i32) -> (i32, i32) {
    %c0_i32 = arith.constant 0 : i32
    %c0_i32_0 = arith.constant 0 : i32
    %c0_i32_1 = arith.constant 0 : i32
    return %c0_i32, %c0_i32_0 : i32, i32
  }
  func.func @transform_3(%arg0: i32) -> (i32, i32) {
    %c0_i32 = arith.constant 0 : i32
    %c0_i32_0 = arith.constant 0 : i32
    return %arg0, %c0_i32 : i32, i32
  }
}

</mosaic_0001>

<llo_original>
// kernel: custom-call.2
$region0: #{custom-call.2}
  %s0 = inlined_call_operand.vmem [shape: f32[16,16], index: 0, kind: input, shape index: {}]
  %s1 = inlined_call_operand.vmem [shape: f32[16,16], index: 1, kind: input, shape index: {}]
  %s2 = inlined_call_operand.vmem [shape: f32[16,16], index: 2, kind: input, shape index: {}]
  %s3 = inlined_call_operand.vmem [shape: f32[16,16], index: 3, kind: input, shape index: {}]
  %s4 = inlined_call_operand.vmem [shape: f32[16], index: 4, kind: output, shape index: {0}]
  %s5 = inlined_call_operand.vmem [shape: f32[16], index: 5, kind: output, shape index: {1}]
  %s6 = inlined_call_operand.vmem [shape: f32[16,16], index: 6, kind: output, shape index: {2}]
  %s7 = inlined_call_operand.vmem [shape: f32[16,16], index: 7, kind: output, shape index: {3}]
  %s8 = inlined_call_operand.vmem [shape: f32[16,16], index: 8, kind: output, shape index: {4}]
  %s9 = inlined_call_operand.vmem [shape: f32[16,16], index: 9, kind: output, shape index: {5}]
  %10 = xla_tuple %s4, %s5, %s6, %s7, %s8, %s9
  $region1: #{custom-call.2} parent=0
    #allocation0 [shape = 'u8[8192]{0}', space=vmem, size = 0x2000, scoped, tag = 'operand span for operand 0']
    #allocation1 [shape = 'u8[8192]{0}', space=vmem, size = 0x2000, scoped, tag = 'operand span for operand 1']
    #allocation2 [shape = 'u8[8192]{0}', space=vmem, size = 0x2000, scoped, tag = 'operand span for operand 2']
    #allocation3 [shape = 'u8[8192]{0}', space=vmem, size = 0x2000, scoped, tag = 'operand span for operand 3']
    #allocation4 [shape = 'u8[4096]{0}', space=vmem, size = 0x1000, scoped, tag = 'operand span for operand 4']
    #allocation5 [shape = 'u8[512]{0}', space=vmem, size = 0x400, scoped, tag = 'packed  for operand 4']
    #allocation6 [shape = 'u8[4096]{0}', space=vmem, size = 0x1000, scoped, tag = 'operand span for operand 5']
    #allocation7 [shape = 'u8[512]{0}', space=vmem, size = 0x400, scoped, tag = 'packed  for operand 5']
    #allocation8 [shape = 'u8[8192]{0}', space=vmem, size = 0x2000, scoped, tag = 'operand span for operand 6']
    #allocation9 [shape = 'u8[8192]{0}', space=vmem, size = 0x2000, scoped, tag = 'operand span for operand 7']
    #allocation10 [shape = 'u8[8192]{0}', space=vmem, size = 0x2000, scoped, tag = 'operand span for operand 8']
    #allocation11 [shape = 'u8[8192]{0}', space=vmem, size = 0x2000, scoped, tag = 'operand span for operand 9']
    #allocation12 [shape = 'f32[16,16]{1,0}', space=vmem, size = 0x2000, scoped, tag = 'a top-left matrix']
    #allocation13 [shape = 'f32[16,16]{1,0}', space=vmem, size = 0x2000, scoped, tag = 'a top-right matrix']
    #allocation14 [shape = 'f32[16,16]{1,0}', space=vmem, size = 0x2000, scoped, tag = 'a bottom-left matrix']
    #allocation15 [shape = 'f32[16,16]{1,0}', space=vmem, size = 0x2000, scoped, tag = 'a bottom-right matrix']
    %p12 = scmp.gt.s32.totalorder 16, 0
    // Predicated region
    $region2: #{custom-call.2} parent=1 // pred_check
      %p13 = pneg %p12
    $region3: #{custom-call.2} parent=1 // pred_check_branch
      %15 = sbr.rel (%p13) target = $region5
    $region4: #{custom-call.2} parent=1 // pred_region
      %s16 = sshra.s32 16, 3
      %p17 = scmp.gt.s32.totalorder %s16, 0
      // Predicated region
      $region6: #{custom-call.2} parent=4 // pred_check
        %p18 = pneg %p17
      $region7: #{custom-call.2} parent=4 // pred_check_branch
        %20 = sbr.rel (%p18) target = $region9
      $region8: #{custom-call.2} parent=4 // pred_region
        %s21 = ssub.s32 %s16, 1
        %s22 = smul.u32 %s21, 128
        %s23 = sshra.s32 %s22, 4
        %s24 = scalar_lea.vmem %s0, %s23
        %v25 = vld [vmem:[%s0] sm:$0xff]
        // While loop
        $region10: #{custom-call.2} parent=8 // loop_pre_header
          _
        $region11: #{custom-call.2} parent=8 // loop_header
          %s26 = sphi %s0, %s48
          %s27 = sphi [#allocation0], %s49
          %v28 = vphi %v25, %v50
          %s29 = ssub.s32 %s24, 64
          %p30 = scmp.gt.s32.totalorder %s26, %s29
        $region12: #{custom-call.2} parent=8 // loop_header_branch
          %32 = sbr.rel (%p30) target = $region16
        $region13: #{custom-call.2} parent=8 // loop_body
          %33 = vst [vmem:[%s27] sm:$0xff] %v28
          %v34 = vld [vmem:[%s26 + $0x8] sm:$0xff]
          %35 = vst [vmem:[%s27 + $0x8] sm:$0xff] %v34
          %v36 = vld [vmem:[%s26 + $0x10] sm:$0xff]
          %37 = vst [vmem:[%s27 + $0x10] sm:$0xff] %v36
          %v38 = vld [vmem:[%s26 + $0x18] sm:$0xff]
          %39 = vst [vmem:[%s27 + $0x18] sm:$0xff] %v38
          %v40 = vld [vmem:[%s26 + $0x20] sm:$0xff]
          %41 = vst [vmem:[%s27 + $0x20] sm:$0xff] %v40
          %v42 = vld [vmem:[%s26 + $0x28] sm:$0xff]
          %43 = vst [vmem:[%s27 + $0x28] sm:$0xff] %v42
          %v44 = vld [vmem:[%s26 + $0x30] sm:$0xff]
          %45 = vst [vmem:[%s27 + $0x30] sm:$0xff] %v44
          %v46 = vld [vmem:[%s26 + $0x38] sm:$0xff]
          %47 = vst [vmem:[%s27 + $0x38] sm:$0xff] %v46
        $region14: #{custom-call.2} parent=8 // loop_footer
          %s48 = scalar_lea.vmem %s26, 64
          %s49 = scalar_lea.vmem %s27, 64
          %v50 = vld [vmem:[%s26 + $0x40] sm:$0xff]
        $region15: #{custom-call.2} parent=8 // loop_footer_branch
          %51 = sbr.rel target = $region11
        $region16: #{custom-call.2} parent=8 // loop_exit
          _
        // While loop
        $region17: #{custom-call.2} parent=8 // loop_pre_header
          _
        $region18: #{custom-call.2} parent=8 // loop_header
          %s52 = sphi %s26, %s60
          %s53 = sphi %s27, %s61
          %v54 = vphi %v28, %v54
          %p55 = scmp.gt.s32.totalorder %s52, %s24
        $region19: #{custom-call.2} parent=8 // loop_header_branch
          %57 = sbr.rel (%p55) target = $region23
        $region20: #{custom-call.2} parent=8 // loop_body
          %v58 = vld [vmem:[%s52] sm:$0xff]
          %59 = vst [vmem:[%s53] sm:$0xff] %v58
        $region21: #{custom-call.2} parent=8 // loop_footer
          %s60 = scalar_lea.vmem %s52, 8
          %s61 = scalar_lea.vmem %s53, 8
        $region22: #{custom-call.2} parent=8 // loop_footer_branch
          %62 = sbr.rel target = $region18
        $region23: #{custom-call.2} parent=8 // loop_exit
          _
      $region9: #{custom-call.2} parent=4 // pred_fallthru
        _
      %s63 = sand.u32 16, 7
      %s64 = sshllo.u32 0, %s63
      %s65 = smul.u32 %s16, 128
      %s66 = sshra.s32 %s65, 4
      %s67 = scalar_lea.vmem [#allocation0], %s66
      %s68 = smul.u32 %s16, 128
      %s69 = sshra.s32 %s68, 4
      %s70 = scalar_lea.vmem %s0, %s69
      %v71 = vld [vmem:[%s70] sm:%s64]
      %72 = vst [vmem:[%s67] sm:%s64] %v71
    $region5: #{custom-call.2} parent=1 // pred_fallthru
      _
    %p74 = scmp.gt.s32.totalorder 16, 0
    // Predicated region
    $region24: #{custom-call.2} parent=1 // pred_check
      %p75 = pneg %p74
    $region25: #{custom-call.2} parent=1 // pred_check_branch
      %77 = sbr.rel (%p75) target = $region27
    $region26: #{custom-call.2} parent=1 // pred_region
      %s78 = sshra.s32 16, 3
      %p79 = scmp.gt.s32.totalorder %s78, 0
      // Predicated region
      $region28: #{custom-call.2} parent=26 // pred_check
        %p80 = pneg %p79
      $region29: #{custom-call.2} parent=26 // pred_check_branch
        %82 = sbr.rel (%p80) target = $region31
      $region30: #{custom-call.2} parent=26 // pred_region
        %s83 = ssub.s32 %s78, 1
        %s84 = smul.u32 %s83, 128
        %s85 = sshra.s32 %s84, 4
        %s86 = scalar_lea.vmem %s1, %s85
        %v87 = vld [vmem:[%s1] sm:$0xff]
        // While loop
        $region32: #{custom-call.2} parent=30 // loop_pre_header
          _
        $region33: #{custom-call.2} parent=30 // loop_header
          %s88 = sphi %s1, %s110
          %s89 = sphi [#allocation1], %s111
          %v90 = vphi %v87, %v112
          %s91 = ssub.s32 %s86, 64
          %p92 = scmp.gt.s32.totalorder %s88, %s91
        $region34: #{custom-call.2} parent=30 // loop_header_branch
          %94 = sbr.rel (%p92) target = $region38
        $region35: #{custom-call.2} parent=30 // loop_body
          %95 = vst [vmem:[%s89] sm:$0xff] %v90
          %v96 = vld [vmem:[%s88 + $0x8] sm:$0xff]
          %97 = vst [vmem:[%s89 + $0x8] sm:$0xff] %v96
          %v98 = vld [vmem:[%s88 + $0x10] sm:$0xff]
          %99 = vst [vmem:[%s89 + $0x10] sm:$0xff] %v98
          %v100 = vld [vmem:[%s88 + $0x18] sm:$0xff]
          %101 = vst [vmem:[%s89 + $0x18] sm:$0xff] %v100
          %v102 = vld [vmem:[%s88 + $0x20] sm:$0xff]
          %103 = vst [vmem:[%s89 + $0x20] sm:$0xff] %v102
          %v104 = vld [vmem:[%s88 + $0x28] sm:$0xff]
          %105 = vst [vmem:[%s89 + $0x28] sm:$0xff] %v104
          %v106 = vld [vmem:[%s88 + $0x30] sm:$0xff]
          %107 = vst [vmem:[%s89 + $0x30] sm:$0xff] %v106
          %v108 = vld [vmem:[%s88 + $0x38] sm:$0xff]
          %109 = vst [vmem:[%s89 + $0x38] sm:$0xff] %v108
        $region36: #{custom-call.2} parent=30 // loop_footer
          %s110 = scalar_lea.vmem %s88, 64
          %s111 = scalar_lea.vmem %s89, 64
          %v112 = vld [vmem:[%s88 + $0x40] sm:$0xff]
        $region37: #{custom-call.2} parent=30 // loop_footer_branch
          %113 = sbr.rel target = $region33
        $region38: #{custom-call.2} parent=30 // loop_exit
          _
        // While loop
        $region39: #{custom-call.2} parent=30 // loop_pre_header
          _
        $region40: #{custom-call.2} parent=30 // loop_header
          %s114 = sphi %s88, %s122
          %s115 = sphi %s89, %s123
          %v116 = vphi %v90, %v116
          %p117 = scmp.gt.s32.totalorder %s114, %s86
        $region41: #{custom-call.2} parent=30 // loop_header_branch
          %119 = sbr.rel (%p117) target = $region45
        $region42: #{custom-call.2} parent=30 // loop_body
          %v120 = vld [vmem:[%s114] sm:$0xff]
          %121 = vst [vmem:[%s115] sm:$0xff] %v120
        $region43: #{custom-call.2} parent=30 // loop_footer
          %s122 = scalar_lea.vmem %s114, 8
          %s123 = scalar_lea.vmem %s115, 8
        $region44: #{custom-call.2} parent=30 // loop_footer_branch
          %124 = sbr.rel target = $region40
        $region45: #{custom-call.2} parent=30 // loop_exit
          _
      $region31: #{custom-call.2} parent=26 // pred_fallthru
        _
      %s125 = sand.u32 16, 7
      %s126 = sshllo.u32 0, %s125
      %s127 = smul.u32 %s78, 128
      %s128 = sshra.s32 %s127, 4
      %s129 = scalar_lea.vmem [#allocation1], %s128
      %s130 = smul.u32 %s78, 128
      %s131 = sshra.s32 %s130, 4
      %s132 = scalar_lea.vmem %s1, %s131
      %v133 = vld [vmem:[%s132] sm:%s126]
      %134 = vst [vmem:[%s129] sm:%s126] %v133
    $region27: #{custom-call.2} parent=1 // pred_fallthru
      _
    %p136 = scmp.gt.s32.totalorder 16, 0
    // Predicated region
    $region46: #{custom-call.2} parent=1 // pred_check
      %p137 = pneg %p136
    $region47: #{custom-call.2} parent=1 // pred_check_branch
      %139 = sbr.rel (%p137) target = $region49
    $region48: #{custom-call.2} parent=1 // pred_region
      %s140 = sshra.s32 16, 3
      %p141 = scmp.gt.s32.totalorder %s140, 0
      // Predicated region
      $region50: #{custom-call.2} parent=48 // pred_check
        %p142 = pneg %p141
      $region51: #{custom-call.2} parent=48 // pred_check_branch
        %144 = sbr.rel (%p142) target = $region53
      $region52: #{custom-call.2} parent=48 // pred_region
        %s145 = ssub.s32 %s140, 1
        %s146 = smul.u32 %s145, 128
        %s147 = sshra.s32 %s146, 4
        %s148 = scalar_lea.vmem %s2, %s147
        %v149 = vld [vmem:[%s2] sm:$0xff]
        // While loop
        $region54: #{custom-call.2} parent=52 // loop_pre_header
          _
        $region55: #{custom-call.2} parent=52 // loop_header
          %s150 = sphi %s2, %s172
          %s151 = sphi [#allocation2], %s173
          %v152 = vphi %v149, %v174
          %s153 = ssub.s32 %s148, 64
          %p154 = scmp.gt.s32.totalorder %s150, %s153
        $region56: #{custom-call.2} parent=52 // loop_header_branch
          %156 = sbr.rel (%p154) target = $region60
        $region57: #{custom-call.2} parent=52 // loop_body
          %157 = vst [vmem:[%s151] sm:$0xff] %v152
          %v158 = vld [vmem:[%s150 + $0x8] sm:$0xff]
          %159 = vst [vmem:[%s151 + $0x8] sm:$0xff] %v158
          %v160 = vld [vmem:[%s150 + $0x10] sm:$0xff]
          %161 = vst [vmem:[%s151 + $0x10] sm:$0xff] %v160
          %v162 = vld [vmem:[%s150 + $0x18] sm:$0xff]
          %163 = vst [vmem:[%s151 + $0x18] sm:$0xff] %v162
          %v164 = vld [vmem:[%s150 + $0x20] sm:$0xff]
          %165 = vst [vmem:[%s151 + $0x20] sm:$0xff] %v164
          %v166 = vld [vmem:[%s150 + $0x28] sm:$0xff]
          %167 = vst [vmem:[%s151 + $0x28] sm:$0xff] %v166
          %v168 = vld [vmem:[%s150 + $0x30] sm:$0xff]
          %169 = vst [vmem:[%s151 + $0x30] sm:$0xff] %v168
          %v170 = vld [vmem:[%s150 + $0x38] sm:$0xff]
          %171 = vst [vmem:[%s151 + $0x38] sm:$0xff] %v170
        $region58: #{custom-call.2} parent=52 // loop_footer
          %s172 = scalar_lea.vmem %s150, 64
          %s173 = scalar_lea.vmem %s151, 64
          %v174 = vld [vmem:[%s150 + $0x40] sm:$0xff]
        $region59: #{custom-call.2} parent=52 // loop_footer_branch
          %175 = sbr.rel target = $region55
        $region60: #{custom-call.2} parent=52 // loop_exit
          _
        // While loop
        $region61: #{custom-call.2} parent=52 // loop_pre_header
          _
        $region62: #{custom-call.2} parent=52 // loop_header
          %s176 = sphi %s150, %s184
          %s177 = sphi %s151, %s185
          %v178 = vphi %v152, %v178
          %p179 = scmp.gt.s32.totalorder %s176, %s148
        $region63: #{custom-call.2} parent=52 // loop_header_branch
          %181 = sbr.rel (%p179) target = $region67
        $region64: #{custom-call.2} parent=52 // loop_body
          %v182 = vld [vmem:[%s176] sm:$0xff]
          %183 = vst [vmem:[%s177] sm:$0xff] %v182
        $region65: #{custom-call.2} parent=52 // loop_footer
          %s184 = scalar_lea.vmem %s176, 8
          %s185 = scalar_lea.vmem %s177, 8
        $region66: #{custom-call.2} parent=52 // loop_footer_branch
          %186 = sbr.rel target = $region62
        $region67: #{custom-call.2} parent=52 // loop_exit
          _
      $region53: #{custom-call.2} parent=48 // pred_fallthru
        _
      %s187 = sand.u32 16, 7
      %s188 = sshllo.u32 0, %s187
      %s189 = smul.u32 %s140, 128
      %s190 = sshra.s32 %s189, 4
      %s191 = scalar_lea.vmem [#allocation2], %s190
      %s192 = smul.u32 %s140, 128
      %s193 = sshra.s32 %s192, 4
      %s194 = scalar_lea.vmem %s2, %s193
      %v195 = vld [vmem:[%s194] sm:%s188]
      %196 = vst [vmem:[%s191] sm:%s188] %v195
    $region49: #{custom-call.2} parent=1 // pred_fallthru
      _
    %p198 = scmp.gt.s32.totalorder 16, 0
    // Predicated region
    $region68: #{custom-call.2} parent=1 // pred_check
      %p199 = pneg %p198
    $region69: #{custom-call.2} parent=1 // pred_check_branch
      %201 = sbr.rel (%p199) target = $region71
    $region70: #{custom-call.2} parent=1 // pred_region
      %s202 = sshra.s32 16, 3
      %p203 = scmp.gt.s32.totalorder %s202, 0
      // Predicated region
      $region72: #{custom-call.2} parent=70 // pred_check
        %p204 = pneg %p203
      $region73: #{custom-call.2} parent=70 // pred_check_branch
        %206 = sbr.rel (%p204) target = $region75
      $region74: #{custom-call.2} parent=70 // pred_region
        %s207 = ssub.s32 %s202, 1
        %s208 = smul.u32 %s207, 128
        %s209 = sshra.s32 %s208, 4
        %s210 = scalar_lea.vmem %s3, %s209
        %v211 = vld [vmem:[%s3] sm:$0xff]
        // While loop
        $region76: #{custom-call.2} parent=74 // loop_pre_header
          _
        $region77: #{custom-call.2} parent=74 // loop_header
          %s212 = sphi %s3, %s234
          %s213 = sphi [#allocation3], %s235
          %v214 = vphi %v211, %v236
          %s215 = ssub.s32 %s210, 64
          %p216 = scmp.gt.s32.totalorder %s212, %s215
        $region78: #{custom-call.2} parent=74 // loop_header_branch
          %218 = sbr.rel (%p216) target = $region82
        $region79: #{custom-call.2} parent=74 // loop_body
          %219 = vst [vmem:[%s213] sm:$0xff] %v214
          %v220 = vld [vmem:[%s212 + $0x8] sm:$0xff]
          %221 = vst [vmem:[%s213 + $0x8] sm:$0xff] %v220
          %v222 = vld [vmem:[%s212 + $0x10] sm:$0xff]
          %223 = vst [vmem:[%s213 + $0x10] sm:$0xff] %v222
          %v224 = vld [vmem:[%s212 + $0x18] sm:$0xff]
          %225 = vst [vmem:[%s213 + $0x18] sm:$0xff] %v224
          %v226 = vld [vmem:[%s212 + $0x20] sm:$0xff]
          %227 = vst [vmem:[%s213 + $0x20] sm:$0xff] %v226
          %v228 = vld [vmem:[%s212 + $0x28] sm:$0xff]
          %229 = vst [vmem:[%s213 + $0x28] sm:$0xff] %v228
          %v230 = vld [vmem:[%s212 + $0x30] sm:$0xff]
          %231 = vst [vmem:[%s213 + $0x30] sm:$0xff] %v230
          %v232 = vld [vmem:[%s212 + $0x38] sm:$0xff]
          %233 = vst [vmem:[%s213 + $0x38] sm:$0xff] %v232
        $region80: #{custom-call.2} parent=74 // loop_footer
          %s234 = scalar_lea.vmem %s212, 64
          %s235 = scalar_lea.vmem %s213, 64
          %v236 = vld [vmem:[%s212 + $0x40] sm:$0xff]
        $region81: #{custom-call.2} parent=74 // loop_footer_branch
          %237 = sbr.rel target = $region77
        $region82: #{custom-call.2} parent=74 // loop_exit
          _
        // While loop
        $region83: #{custom-call.2} parent=74 // loop_pre_header
          _
        $region84: #{custom-call.2} parent=74 // loop_header
          %s238 = sphi %s212, %s246
          %s239 = sphi %s213, %s247
          %v240 = vphi %v214, %v240
          %p241 = scmp.gt.s32.totalorder %s238, %s210
        $region85: #{custom-call.2} parent=74 // loop_header_branch
          %243 = sbr.rel (%p241) target = $region89
        $region86: #{custom-call.2} parent=74 // loop_body
          %v244 = vld [vmem:[%s238] sm:$0xff]
          %245 = vst [vmem:[%s239] sm:$0xff] %v244
        $region87: #{custom-call.2} parent=74 // loop_footer
          %s246 = scalar_lea.vmem %s238, 8
          %s247 = scalar_lea.vmem %s239, 8
        $region88: #{custom-call.2} parent=74 // loop_footer_branch
          %248 = sbr.rel target = $region84
        $region89: #{custom-call.2} parent=74 // loop_exit
          _
      $region75: #{custom-call.2} parent=70 // pred_fallthru
        _
      %s249 = sand.u32 16, 7
      %s250 = sshllo.u32 0, %s249
      %s251 = smul.u32 %s202, 128
      %s252 = sshra.s32 %s251, 4
      %s253 = scalar_lea.vmem [#allocation3], %s252
      %s254 = smul.u32 %s202, 128
      %s255 = sshra.s32 %s254, 4
      %s256 = scalar_lea.vmem %s3, %s255
      %v257 = vld [vmem:[%s256] sm:%s250]
      %258 = vst [vmem:[%s253] sm:%s250] %v257
    $region71: #{custom-call.2} parent=1 // pred_fallthru
      _
    %s259 = smov [#allocation12]
    %v260 = vld [vmem:[#allocation0] sm:$0xff]
    %261 = vst [vmem:[%s259] sm:$0xff] %v260
    %s262 = scalar_lea.vmem %s259, 8
    %s263 = scalar_lea.vmem [#allocation0], 8
    %v264 = vld [vmem:[%s263] sm:$0xff]
    %265 = vst [vmem:[%s262] sm:$0xff] %v264
    %s266 = smov [#allocation13]
    %v267 = vld [vmem:[#allocation1] sm:$0xff]
    %268 = vst [vmem:[%s266] sm:$0xff] %v267
    %s269 = scalar_lea.vmem %s266, 8
    %s270 = scalar_lea.vmem [#allocation1], 8
    %v271 = vld [vmem:[%s270] sm:$0xff]
    %272 = vst [vmem:[%s269] sm:$0xff] %v271
    %s273 = smov [#allocation14]
    %v274 = vld [vmem:[#allocation2] sm:$0xff]
    %275 = vst [vmem:[%s273] sm:$0xff] %v274
    %s276 = scalar_lea.vmem %s273, 8
    %s277 = scalar_lea.vmem [#allocation2], 8
    %v278 = vld [vmem:[%s277] sm:$0xff]
    %279 = vst [vmem:[%s276] sm:$0xff] %v278
    %s280 = smov [#allocation15]
    %v281 = vld [vmem:[#allocation3] sm:$0xff]
    %282 = vst [vmem:[%s280] sm:$0xff] %v281
    %s283 = scalar_lea.vmem %s280, 8
    %s284 = scalar_lea.vmem [#allocation3], 8
    %v285 = vld [vmem:[%s284] sm:$0xff]
    %286 = vst [vmem:[%s283] sm:$0xff] %v285
    %287 = vst [vmem:[#allocation8] sm:$0xff] 0.0
    %s288 = scalar_lea.vmem [#allocation8], 8
    %289 = vst [vmem:[%s288] sm:$0xff] 0.0
    %290 = vst [vmem:[#allocation9] sm:$0xff] 0.0
    %s291 = scalar_lea.vmem [#allocation9], 8
    %292 = vst [vmem:[%s291] sm:$0xff] 0.0
    %293 = vst [vmem:[#allocation10] sm:$0xff] 0.0
    %s294 = scalar_lea.vmem [#allocation10], 8
    %295 = vst [vmem:[%s294] sm:$0xff] 0.0
    %296 = vst [vmem:[#allocation11] sm:$0xff] 0.0
    %s297 = scalar_lea.vmem [#allocation11], 8
    %298 = vst [vmem:[%s297] sm:$0xff] 0.0
    %s299 = smov [#allocation8]
    %v300 = vlaneseq
    %v301 = vand.u32 %v300, 127
    %v302 = vmov %v301
    %v303 = vlaneseq
    %v304 = vshrl.u32 %v303, 7
    %v305 = vmov %v304
    %v306 = vld [vmem:[%s299] sm:$0xff]
    %vm309 = vcmp.eq.s32.totalorder %v305, %v302
    %v310 = vsel %vm309, 1.0, %v306
    %311 = vst [vmem:[%s299] sm:$0xff] %v310
    %s312 = scalar_lea.vmem %s299, 8
    %v313 = vld [vmem:[%s312] sm:$0xff]
    %v315 = vadd.s32 %v305, 8
    %vm316 = vcmp.eq.s32.totalorder %v315, %v302
    %v317 = vsel %vm316, 1.0, %v313
    %318 = vst [vmem:[%s312] sm:$0xff] %v317
    %s319 = smov [#allocation11]
    %v320 = vlaneseq
    %v321 = vand.u32 %v320, 127
    %v322 = vmov %v321
    %v323 = vlaneseq
    %v324 = vshrl.u32 %v323, 7
    %v325 = vmov %v324
    %v326 = vld [vmem:[%s319] sm:$0xff]
    %vm329 = vcmp.eq.s32.totalorder %v325, %v322
    %v330 = vsel %vm329, 1.0, %v326
    %331 = vst [vmem:[%s319] sm:$0xff] %v330
    %s332 = scalar_lea.vmem %s319, 8
    %v333 = vld [vmem:[%s332] sm:$0xff]
    %v335 = vadd.s32 %v325, 8
    %vm336 = vcmp.eq.s32.totalorder %v335, %v322
    %v337 = vsel %vm336, 1.0, %v333
    %338 = vst [vmem:[%s332] sm:$0xff] %v337
    // While loop
    $region90: #{custom-call.2} parent=1 // loop_pre_header
      _
    $region91: #{custom-call.2} parent=1 // loop_header
      %s340 = sphi 0, %s1238
      %v341 = vlaneseq
      %v342 = vand.u32 %v341, 127
      %v343 = vmov %v342
      %v344 = vlaneseq
      %v345 = vshrl.u32 %v344, 7
      %v346 = vmov %v345
      %s347 = smov [#allocation12]
      %v348 = vlaneseq
      %v349 = vand.u32 %v348, 127
      %vm350 = vcmp.ge.s32.totalorder %v349, 0
      %vm351 = vcmp.lt.s32.totalorder %v349, 16
      %vm352 = vmand %vm350, %vm351
      %v353 = vld [vmem:[%s347] sm:$0xff]
      %v354 = vsel %vm352, %v353, 0.0
      %v355 = vmul.f32 %v354, %v354
      %vm358 = vcmp.eq.s32.totalorder %v346, %v343
      %v359 = vsel %vm358, 0.0, %v355
      %s360 = scalar_lea.vmem %s347, 8
      %v361 = vld [vmem:[%s360] sm:$0xff]
      %v362 = vsel %vm352, %v361, 0.0
      %v363 = vmul.f32 %v362, %v362
      %v365 = vadd.s32 %v346, 8
      %vm366 = vcmp.eq.s32.totalorder %v365, %v343
      %v367 = vsel %vm366, 0.0, %v363
      %v368 = vadd.f32 %v359, %v367
      %v369 = vadd.f32 %v355, %v363
      %v370 = vlaneseq
      %v371 = vand.u32 %v370, 127
      %v372 = vmov %v371
      %v373 = vlaneseq
      %v374 = vshrl.u32 %v373, 7
      %v375 = vmov %v374
      %s376 = smov [#allocation13]
      %v377 = vlaneseq
      %v378 = vand.u32 %v377, 127
      %vm379 = vcmp.ge.s32.totalorder %v378, 0
      %vm380 = vcmp.lt.s32.totalorder %v378, 16
      %vm381 = vmand %vm379, %vm380
      %v382 = vld [vmem:[%s376] sm:$0xff]
      %v383 = vsel %vm381, %v382, 0.0
      %v384 = vmul.f32 %v383, %v383
      %v385 = vadd.f32 %v368, %v384
      %v386 = vadd.f32 %v369, %v384
      %s387 = scalar_lea.vmem %s376, 8
      %v388 = vld [vmem:[%s387] sm:$0xff]
      %v389 = vsel %vm381, %v388, 0.0
      %v390 = vmul.f32 %v389, %v389
      %v391 = vadd.f32 %v385, %v390
      %v392 = vadd.f32 %v386, %v390
      %v393 = vlaneseq
      %v394 = vand.u32 %v393, 127
      %v395 = vmov %v394
      %v396 = vlaneseq
      %v397 = vshrl.u32 %v396, 7
      %v398 = vmov %v397
      %s399 = smov [#allocation14]
      %v400 = vlaneseq
      %v401 = vand.u32 %v400, 127
      %vm402 = vcmp.ge.s32.totalorder %v401, 0
      %vm403 = vcmp.lt.s32.totalorder %v401, 16
      %vm404 = vmand %vm402, %vm403
      %v405 = vld [vmem:[%s399] sm:$0xff]
      %v406 = vsel %vm404, %v405, 0.0
      %v407 = vmul.f32 %v406, %v406
      %v408 = vadd.f32 %v391, %v407
      %v409 = vadd.f32 %v392, %v407
      %s410 = scalar_lea.vmem %s399, 8
      %v411 = vld [vmem:[%s410] sm:$0xff]
      %v412 = vsel %vm404, %v411, 0.0
      %v413 = vmul.f32 %v412, %v412
      %v414 = vadd.f32 %v408, %v413
      %v415 = vadd.f32 %v409, %v413
      %v416 = vlaneseq
      %v417 = vand.u32 %v416, 127
      %v418 = vmov %v417
      %v419 = vlaneseq
      %v420 = vshrl.u32 %v419, 7
      %v421 = vmov %v420
      %s422 = smov [#allocation15]
      %v423 = vlaneseq
      %v424 = vand.u32 %v423, 127
      %vm425 = vcmp.ge.s32.totalorder %v424, 0
      %vm426 = vcmp.lt.s32.totalorder %v424, 16
      %vm427 = vmand %vm425, %vm426
      %v428 = vld [vmem:[%s422] sm:$0xff]
      %v429 = vsel %vm427, %v428, 0.0
      %v430 = vmul.f32 %v429, %v429
      %vm433 = vcmp.eq.s32.totalorder %v421, %v418
      %v434 = vsel %vm433, 0.0, %v430
      %v435 = vadd.f32 %v414, %v434
      %v436 = vadd.f32 %v415, %v430
      %s437 = scalar_lea.vmem %s422, 8
      %v438 = vld [vmem:[%s437] sm:$0xff]
      %v439 = vsel %vm427, %v438, 0.0
      %v440 = vmul.f32 %v439, %v439
      %v442 = vadd.s32 %v421, 8
      %vm443 = vcmp.eq.s32.totalorder %v442, %v418
      %v444 = vsel %vm443, 0.0, %v440
      %v445 = vadd.f32 %v435, %v444
      %v446 = vadd.f32 %v436, %v440
      %447 = vadd.xlane.f32.xlu0 %v446
      %v448 = vpop.xlane.xlu0 %447
      %v449 = vrot.slane %v448, 4
      %v450 = vadd.f32 %v448, %v449
      %v451 = vrot.slane %v450, 2
      %v452 = vadd.f32 %v450, %v451
      %v453 = vrot.slane %v452, 1
      %v454 = vadd.f32 %v452, %v453
      %455 = vadd.xlane.f32.xlu0 %v445
      %v456 = vpop.xlane.xlu0 %455
      %v457 = vrot.slane %v456, 4
      %v458 = vadd.f32 %v456, %v457
      %v459 = vrot.slane %v458, 2
      %v460 = vadd.f32 %v458, %v459
      %v461 = vrot.slane %v460, 1
      %v462 = vadd.f32 %v460, %v461
      %s463 = vtos %v462
      %s464 = vtos %v454
      %s465 = smul.f32 1e-10, %s464
      %p466 = scmp.le.f32.partialorder %s463, %s465
      %p467 = scmp.ge.s32.totalorder %s340, 15
      %p468 = por %p466, %p467
    $region92: #{custom-call.2} parent=1 // loop_header_branch
      %1240 = sbr.rel (%p468) target = $region96
    $region93: #{custom-call.2} parent=1 // loop_body
      loop: start=0, step=1, limit=31
      $region97: #{custom-call.2} parent=93 // loop_pre_header
        _
      $region98: #{custom-call.2} parent=93 // loop_header
        %s470 = sphi 0, %s474
        %p471 = scmp.ge.s32.totalorder %s470, 31
      $region99: #{custom-call.2} parent=93 // loop_header_branch
        %473 = sbr.rel (%p471) target = $region103
      $region100: #{custom-call.2} parent=93 // loop_body
        #allocation16 [shape = 'f32[1024]{0}', space=vmem, size = 0x1000, scoped, tag = 'a_tl_diag vmem']
        #allocation17 [shape = 'f32[1024]{0}', space=vmem, size = 0x1000, scoped, tag = 'a_tr_diag vmem']
        #allocation18 [shape = 'f32[1024]{0}', space=vmem, size = 0x1000, scoped, tag = 'a_br_diag vmem']
        #allocation19 [shape = 'f32[1024]{0}', space=vmem, size = 0x1000, scoped, tag = 'rt1 vmem']
        #allocation20 [shape = 'f32[1024]{0}', space=vmem, size = 0x1000, scoped, tag = 'rt2 vmem']
        #allocation21 [shape = 'f32[1024]{0}', space=vmem, size = 0x1000, scoped, tag = 'c vmem']
        #allocation22 [shape = 'f32[1024]{0}', space=vmem, size = 0x1000, scoped, tag = 's vmem']
        #allocation23 [shape = 'f32[8192]{0}', space=vmem, size = 0x8000, scoped, tag = 'c broadcast']
        #allocation24 [shape = 'f32[8192]{0}', space=vmem, size = 0x8000, scoped, tag = 's broadcast']
        %s475 = smov [#allocation12]
        %s476 = smov [#allocation16]
        %v477 = vlaneseq
        %v478 = vand.u32 %v477, 127
        %v479 = vmov %v478
        %v480 = vlaneseq
        %v481 = vshrl.u32 %v480, 7
        %v482 = vmov %v481
        %v483 = vld [vmem:[%s475] sm:$0xff]
        %vm486 = vcmp.eq.s32.totalorder %v482, %v479
        %v487 = vsel %vm486, %v483, 0.0
        %s488 = scalar_lea.vmem %s475, 8
        %v489 = vld [vmem:[%s488] sm:$0xff]
        %v491 = vadd.s32 %v482, 8
        %vm492 = vcmp.eq.s32.totalorder %v491, %v479
        %v493 = vsel %vm492, %v489, %v487
        %v494 = vrot.slane %v493, 4
        %v495 = vadd.f32 %v493, %v494
        %v496 = vrot.slane %v495, 2
        %v497 = vadd.f32 %v495, %v496
        %v498 = vrot.slane %v497, 1
        %v499 = vadd.f32 %v497, %v498
        %500 = vst [vmem:[%s476] sm:$0x1] %v499
        %s501 = smov [#allocation13]
        %s502 = smov [#allocation17]
        %v503 = vlaneseq
        %v504 = vand.u32 %v503, 127
        %v505 = vmov %v504
        %v506 = vlaneseq
        %v507 = vshrl.u32 %v506, 7
        %v508 = vmov %v507
        %v509 = vld [vmem:[%s501] sm:$0xff]
        %vm512 = vcmp.eq.s32.totalorder %v508, %v505
        %v513 = vsel %vm512, %v509, 0.0
        %s514 = scalar_lea.vmem %s501, 8
        %v515 = vld [vmem:[%s514] sm:$0xff]
        %v517 = vadd.s32 %v508, 8
        %vm518 = vcmp.eq.s32.totalorder %v517, %v505
        %v519 = vsel %vm518, %v515, %v513
        %v520 = vrot.slane %v519, 4
        %v521 = vadd.f32 %v519, %v520
        %v522 = vrot.slane %v521, 2
        %v523 = vadd.f32 %v521, %v522
        %v524 = vrot.slane %v523, 1
        %v525 = vadd.f32 %v523, %v524
        %526 = vst [vmem:[%s502] sm:$0x1] %v525
        %s527 = smov [#allocation15]
        %s528 = smov [#allocation18]
        %v529 = vlaneseq
        %v530 = vand.u32 %v529, 127
        %v531 = vmov %v530
        %v532 = vlaneseq
        %v533 = vshrl.u32 %v532, 7
        %v534 = vmov %v533
        %v535 = vld [vmem:[%s527] sm:$0xff]
        %vm538 = vcmp.eq.s32.totalorder %v534, %v531
        %v539 = vsel %vm538, %v535, 0.0
        %s540 = scalar_lea.vmem %s527, 8
        %v541 = vld [vmem:[%s540] sm:$0xff]
        %v543 = vadd.s32 %v534, 8
        %vm544 = vcmp.eq.s32.totalorder %v543, %v531
        %v545 = vsel %vm544, %v541, %v539
        %v546 = vrot.slane %v545, 4
        %v547 = vadd.f32 %v545, %v546
        %v548 = vrot.slane %v547, 2
        %v549 = vadd.f32 %v547, %v548
        %v550 = vrot.slane %v549, 1
        %v551 = vadd.f32 %v549, %v550
        %552 = vst [vmem:[%s528] sm:$0x1] %v551
        %s553 = smov [#allocation21]
        %s554 = smov [#allocation22]
        %s555 = smov [#allocation16]
        %v556 = vld [vmem:[%s555] sm:$0xff]
        %s557 = smov [#allocation17]
        %v558 = vld [vmem:[%s557] sm:$0xff]
        %s559 = smov [#allocation18]
        %v560 = vld [vmem:[%s559] sm:$0xff]
        %v561 = vsub.f32 %v560, %v556
        %v562 = vmul.f32 2.0, %v558
        %v563 = vrcp.pop %v562
        %v564 = vmul.f32 %v561, %v563
        %vm565 = vcmp.ge.f32.partialorder %v564, 0.0
        %v566 = vmul.f32 %v564, %v564
        %v567 = vadd.f32 1.0, %v566
        %v568 = vrsqrt.pop %v567
        %v569 = vmul.f32 %v567, %v568
        %vm570 = vcmp.eq.f32.partialorder %v567, inf
        %v571 = vsel %vm570, %v567, %v569
        %vm572 = vcmp.eq.f32.partialorder %v567, 0.0
        %v573 = vand.u32 %v567, 2147483648
        %v574 = vsel %vm572, %v573, %v571
        %v575 = vxor.u32 %v574, 2147483648
        %v576 = vsel %vm565, %v574, %v575
        %v577 = vadd.f32 %v564, %v576
        %v578 = vrcp.pop %v577
        %v579 = vand.u32 2147483647, %v556
        %v580 = vand.u32 2147483647, %v558
        %v581 = vand.u32 2147483647, %v560
        %v582 = vmin.f32 %v579, %v581
        %v583 = vmul.f32 1.1920929e-08, %v582
        %vm584 = vcmp.le.f32.partialorder %v580, %v583
        %v585 = vsel %vm584, 0.0, %v578
        %v586 = vmul.f32 %v585, %v585
        %v587 = vadd.f32 1.0, %v586
        %v588 = vrsqrt.pop %v587
        %v589 = vmul.f32 %v585, %v588
        %v590 = vmul.f32 %v585, %v558
        %v591 = vsub.f32 %v556, %v590
        %v592 = vmul.f32 %v585, %v558
        %v593 = vadd.f32 %v560, %v592
        %s594 = smov [#allocation19]
        %595 = vst [vmem:[%s594] sm:$0xff] %v591
        %s596 = smov [#allocation20]
        %597 = vst [vmem:[%s596] sm:$0xff] %v593
        %s598 = smov %s553
        %599 = vst [vmem:[%s598] sm:$0xff] %v588
        %s600 = smov %s554
        %601 = vst [vmem:[%s600] sm:$0xff] %v589
        %s602 = smov [#allocation21]
        %v603 = vld [vmem:[%s602] ss:$0 sm:$0xff]
        %v604 = vlaneseq
        %v605 = vand.u32 %v604, 127
        %v606 = vmov %v605
        %v607 = vlaneseq
        %v608 = vshrl.u32 %v607, 7
        %v609 = vmov %v608
        %vm611 = vcmp.eq.s32.totalorder %v609, %v606
        %v612 = vsel %vm611, %v603, 0.0
        %613 = vadd.xlane.f32.xlu0 %v612
        %v614 = vpop.xlane.xlu0 %613
        %s615 = smov [#allocation23]
        %616 = vst [vmem:[%s615] sm:$0xff] %v614
        %s617 = smov [#allocation21]
        %v618 = vld [vmem:[%s617] ss:$0 sm:$0xff]
        %v619 = vlaneseq
        %v620 = vand.u32 %v619, 127
        %v621 = vmov %v620
        %v622 = vlaneseq
        %v623 = vshrl.u32 %v622, 7
        %v624 = vmov %v623
        %v625 = vadd.s32 %v624, 8
        %vm626 = vcmp.eq.s32.totalorder %v625, %v621
        %v627 = vsel %vm626, %v618, 0.0
        %628 = vadd.xlane.f32.xlu0 %v627
        %v629 = vpop.xlane.xlu0 %628
        %s630 = smov [#allocation23]
        %s631 = scalar_lea.vmem %s630, 8
        %632 = vst [vmem:[%s631] sm:$0xff] %v629
        %s633 = smov [#allocation22]
        %v634 = vld [vmem:[%s633] ss:$0 sm:$0xff]
        %v635 = vlaneseq
        %v636 = vand.u32 %v635, 127
        %v637 = vmov %v636
        %v638 = vlaneseq
        %v639 = vshrl.u32 %v638, 7
        %v640 = vmov %v639
        %vm642 = vcmp.eq.s32.totalorder %v640, %v637
        %v643 = vsel %vm642, %v634, 0.0
        %644 = vadd.xlane.f32.xlu0 %v643
        %v645 = vpop.xlane.xlu0 %644
        %s646 = smov [#allocation24]
        %647 = vst [vmem:[%s646] sm:$0xff] %v645
        %s648 = smov [#allocation22]
        %v649 = vld [vmem:[%s648] ss:$0 sm:$0xff]
        %v650 = vlaneseq
        %v651 = vand.u32 %v650, 127
        %v652 = vmov %v651
        %v653 = vlaneseq
        %v654 = vshrl.u32 %v653, 7
        %v655 = vmov %v654
        %v656 = vadd.s32 %v655, 8
        %vm657 = vcmp.eq.s32.totalorder %v656, %v652
        %v658 = vsel %vm657, %v649, 0.0
        %659 = vadd.xlane.f32.xlu0 %v658
        %v660 = vpop.xlane.xlu0 %659
        %s661 = smov [#allocation24]
        %s662 = scalar_lea.vmem %s661, 8
        %663 = vst [vmem:[%s662] sm:$0xff] %v660
        %s664 = smov [#allocation23]
        %v665 = vld [vmem:[%s664] sm:$0xff]
        %s666 = smov [#allocation24]
        %v667 = vld [vmem:[%s666] sm:$0xff]
        %s668 = smov [#allocation12]
        %s669 = smov [#allocation13]
        %s670 = smov [#allocation14]
        %s671 = smov [#allocation15]
        %v672 = vld [vmem:[%s668] sm:$0xff]
        %v673 = vld [vmem:[%s669] sm:$0xff]
        %v674 = vld [vmem:[%s670] sm:$0xff]
        %v675 = vld [vmem:[%s671] sm:$0xff]
        %v676 = vmul.f32 %v665, %v672
        %v677 = vmul.f32 %v667, %v674
        %v678 = vsub.f32 %v676, %v677
        %v679 = vmul.f32 %v665, %v673
        %v680 = vmul.f32 %v667, %v675
        %v681 = vsub.f32 %v679, %v680
        %v682 = vmul.f32 %v667, %v672
        %v683 = vmul.f32 %v665, %v674
        %v684 = vadd.f32 %v682, %v683
        %v685 = vmul.f32 %v667, %v673
        %v686 = vmul.f32 %v665, %v675
        %v687 = vadd.f32 %v685, %v686
        %688 = vst [vmem:[%s668] sm:$0xff] %v678
        %689 = vst [vmem:[%s669] sm:$0xff] %v681
        %690 = vst [vmem:[%s670] sm:$0xff] %v684
        %691 = vst [vmem:[%s671] sm:$0xff] %v687
        %s692 = smov [#allocation23]
        %s693 = scalar_lea.vmem %s692, 8
        %v694 = vld [vmem:[%s693] sm:$0xff]
        %s695 = smov [#allocation24]
        %s696 = scalar_lea.vmem %s695, 8
        %v697 = vld [vmem:[%s696] sm:$0xff]
        %s698 = smov [#allocation12]
        %s699 = scalar_lea.vmem %s698, 8
        %s700 = smov [#allocation13]
        %s701 = scalar_lea.vmem %s700, 8
        %s702 = smov [#allocation14]
        %s703 = scalar_lea.vmem %s702, 8
        %s704 = smov [#allocation15]
        %s705 = scalar_lea.vmem %s704, 8
        %v706 = vld [vmem:[%s699] sm:$0xff]
        %v707 = vld [vmem:[%s701] sm:$0xff]
        %v708 = vld [vmem:[%s703] sm:$0xff]
        %v709 = vld [vmem:[%s705] sm:$0xff]
        %v710 = vmul.f32 %v694, %v706
        %v711 = vmul.f32 %v697, %v708
        %v712 = vsub.f32 %v710, %v711
        %v713 = vmul.f32 %v694, %v707
        %v714 = vmul.f32 %v697, %v709
        %v715 = vsub.f32 %v713, %v714
        %v716 = vmul.f32 %v697, %v706
        %v717 = vmul.f32 %v694, %v708
        %v718 = vadd.f32 %v716, %v717
        %v719 = vmul.f32 %v697, %v707
        %v720 = vmul.f32 %v694, %v709
        %v721 = vadd.f32 %v719, %v720
        %722 = vst [vmem:[%s699] sm:$0xff] %v712
        %723 = vst [vmem:[%s701] sm:$0xff] %v715
        %724 = vst [vmem:[%s703] sm:$0xff] %v718
        %725 = vst [vmem:[%s705] sm:$0xff] %v721
        %s726 = smov [#allocation21]
        %v727 = vld [vmem:[%s726] ss:$0 sm:$0xff]
        %s728 = smov [#allocation22]
        %v729 = vld [vmem:[%s728] ss:$0 sm:$0xff]
        %s730 = smov [#allocation12]
        %s731 = smov [#allocation13]
        %s732 = smov [#allocation14]
        %s733 = smov [#allocation15]
        %v734 = vld [vmem:[%s730] sm:$0xff]
        %v735 = vld [vmem:[%s731] sm:$0xff]
        %v736 = vld [vmem:[%s732] sm:$0xff]
        %v737 = vld [vmem:[%s733] sm:$0xff]
        %v738 = vmul.f32 %v727, %v734
        %v739 = vmul.f32 %v729, %v735
        %v740 = vsub.f32 %v738, %v739
        %v741 = vmul.f32 %v729, %v734
        %v742 = vmul.f32 %v727, %v735
        %v743 = vadd.f32 %v741, %v742
        %v744 = vmul.f32 %v727, %v736
        %v745 = vmul.f32 %v729, %v737
        %v746 = vsub.f32 %v744, %v745
        %v747 = vmul.f32 %v729, %v736
        %v748 = vmul.f32 %v727, %v737
        %v749 = vadd.f32 %v747, %v748
        %750 = vst [vmem:[%s730] sm:$0xff] %v740
        %751 = vst [vmem:[%s731] sm:$0xff] %v743
        %752 = vst [vmem:[%s732] sm:$0xff] %v746
        %753 = vst [vmem:[%s733] sm:$0xff] %v749
        %s754 = smov [#allocation12]
        %s755 = scalar_lea.vmem %s754, 8
        %s756 = smov [#allocation13]
        %s757 = scalar_lea.vmem %s756, 8
        %s758 = smov [#allocation14]
        %s759 = scalar_lea.vmem %s758, 8
        %s760 = smov [#allocation15]
        %s761 = scalar_lea.vmem %s760, 8
        %v762 = vld [vmem:[%s755] sm:$0xff]
        %v763 = vld [vmem:[%s757] sm:$0xff]
        %v764 = vld [vmem:[%s759] sm:$0xff]
        %v765 = vld [vmem:[%s761] sm:$0xff]
        %v766 = vmul.f32 %v727, %v762
        %v767 = vmul.f32 %v729, %v763
        %v768 = vsub.f32 %v766, %v767
        %v769 = vmul.f32 %v729, %v762
        %v770 = vmul.f32 %v727, %v763
        %v771 = vadd.f32 %v769, %v770
        %v772 = vmul.f32 %v727, %v764
        %v773 = vmul.f32 %v729, %v765
        %v774 = vsub.f32 %v772, %v773
        %v775 = vmul.f32 %v729, %v764
        %v776 = vmul.f32 %v727, %v765
        %v777 = vadd.f32 %v775, %v776
        %778 = vst [vmem:[%s755] sm:$0xff] %v768
        %779 = vst [vmem:[%s757] sm:$0xff] %v771
        %780 = vst [vmem:[%s759] sm:$0xff] %v774
        %781 = vst [vmem:[%s761] sm:$0xff] %v777
        %s782 = smov [#allocation12]
        %s783 = smov [#allocation19]
        %v784 = vlaneseq
        %v785 = vand.u32 %v784, 127
        %v786 = vmov %v785
        %v787 = vlaneseq
        %v788 = vshrl.u32 %v787, 7
        %v789 = vmov %v788
        %v790 = vld [vmem:[%s783] ss:$0 sm:$0xff]
        %v791 = vld [vmem:[%s782] sm:$0xff]
        %vm794 = vcmp.eq.s32.totalorder %v789, %v786
        %v795 = vsel %vm794, %v790, %v791
        %796 = vst [vmem:[%s782] sm:$0xff] %v795
        %v797 = vld [vmem:[%s783] ss:$0 sm:$0xff]
        %s798 = scalar_lea.vmem %s782, 8
        %v799 = vld [vmem:[%s798] sm:$0xff]
        %v801 = vadd.s32 %v789, 8
        %vm802 = vcmp.eq.s32.totalorder %v801, %v786
        %v803 = vsel %vm802, %v797, %v799
        %804 = vst [vmem:[%s798] sm:$0xff] %v803
        %s805 = smov [#allocation13]
        %v806 = vlaneseq
        %v807 = vand.u32 %v806, 127
        %v808 = vmov %v807
        %v809 = vlaneseq
        %v810 = vshrl.u32 %v809, 7
        %v811 = vmov %v810
        %v812 = vld [vmem:[%s805] sm:$0xff]
        %vm815 = vcmp.eq.s32.totalorder %v811, %v808
        %v816 = vsel %vm815, 0.0, %v812
        %817 = vst [vmem:[%s805] sm:$0xff] %v816
        %s818 = scalar_lea.vmem %s805, 8
        %v819 = vld [vmem:[%s818] sm:$0xff]
        %v821 = vadd.s32 %v811, 8
        %vm822 = vcmp.eq.s32.totalorder %v821, %v808
        %v823 = vsel %vm822, 0.0, %v819
        %824 = vst [vmem:[%s818] sm:$0xff] %v823
        %s825 = smov [#allocation14]
        %v826 = vlaneseq
        %v827 = vand.u32 %v826, 127
        %v828 = vmov %v827
        %v829 = vlaneseq
        %v830 = vshrl.u32 %v829, 7
        %v831 = vmov %v830
        %v832 = vld [vmem:[%s825] sm:$0xff]
        %vm835 = vcmp.eq.s32.totalorder %v831, %v828
        %v836 = vsel %vm835, 0.0, %v832
        %837 = vst [vmem:[%s825] sm:$0xff] %v836
        %s838 = scalar_lea.vmem %s825, 8
        %v839 = vld [vmem:[%s838] sm:$0xff]
        %v841 = vadd.s32 %v831, 8
        %vm842 = vcmp.eq.s32.totalorder %v841, %v828
        %v843 = vsel %vm842, 0.0, %v839
        %844 = vst [vmem:[%s838] sm:$0xff] %v843
        %s845 = smov [#allocation15]
        %s846 = smov [#allocation20]
        %v847 = vlaneseq
        %v848 = vand.u32 %v847, 127
        %v849 = vmov %v848
        %v850 = vlaneseq
        %v851 = vshrl.u32 %v850, 7
        %v852 = vmov %v851
        %v853 = vld [vmem:[%s846] ss:$0 sm:$0xff]
        %v854 = vld [vmem:[%s845] sm:$0xff]
        %vm857 = vcmp.eq.s32.totalorder %v852, %v849
        %v858 = vsel %vm857, %v853, %v854
        %859 = vst [vmem:[%s845] sm:$0xff] %v858
        %v860 = vld [vmem:[%s846] ss:$0 sm:$0xff]
        %s861 = scalar_lea.vmem %s845, 8
        %v862 = vld [vmem:[%s861] sm:$0xff]
        %v864 = vadd.s32 %v852, 8
        %vm865 = vcmp.eq.s32.totalorder %v864, %v849
        %v866 = vsel %vm865, %v860, %v862
        %867 = vst [vmem:[%s861] sm:$0xff] %v866
        %s868 = smov [#allocation12]
        %s869 = smov [#allocation13]
        %v870 = vld [vmem:[%s869] sm:$0xff]
        %871 = vrot.lane.b32.xlu0 %v870, 1
        %v872 = vpop.permute.xlu0 %871
        %v873 = vld [vmem:[%s868] sm:$0xff]
        %v874 = vld [vmem:[%s868] sm:$0xff]
        %875 = vrot.lane.b32.xlu0 %v874, 1
        %v876 = vpop.permute.xlu0 %875
        %v877 = vlaneseq
        %v878 = vand.u32 %v877, 127
        %vm879 = vcmp.eq.s32.totalorder %v878, 0
        %v880 = vsel %vm879, %v874, %v876
        %v881 = vlaneseq
        %v882 = vand.u32 %v881, 127
        %vm883 = vcmp.eq.s32.totalorder %v882, 1
        %v884 = vsel %vm883, %v872, %v880
        %v885 = vlaneseq
        %v886 = vand.u32 %v885, 127
        %vm887 = vcmp.ge.s32.totalorder %v886, 0
        %vm888 = vcmp.lt.s32.totalorder %v886, 16
        %vm889 = vmand %vm887, %vm888
        %v890 = vsel %vm889, %v884, 0.0
        %v891 = vld [vmem:[%s869] sm:$0xff]
        %892 = vrot.lane.b32.xlu0 %v891, 127
        %v893 = vpop.permute.xlu0 %892
        %v894 = vlaneseq
        %v895 = vand.u32 %v894, 127
        %vm896 = vcmp.eq.s32.totalorder %v895, 15
        %v897 = vsel %vm896, %v873, %v893
        %s898 = smov [#allocation12]
        %s899 = scalar_lea.vmem %s898, 8
        %s900 = smov [#allocation13]
        %s901 = scalar_lea.vmem %s900, 8
        %v902 = vld [vmem:[%s901] sm:$0xff]
        %903 = vrot.lane.b32.xlu0 %v902, 1
        %v904 = vpop.permute.xlu0 %903
        %v905 = vld [vmem:[%s899] sm:$0xff]
        %v906 = vld [vmem:[%s899] sm:$0xff]
        %907 = vrot.lane.b32.xlu0 %v906, 1
        %v908 = vpop.permute.xlu0 %907
        %v909 = vlaneseq
        %v910 = vand.u32 %v909, 127
        %vm911 = vcmp.eq.s32.totalorder %v910, 0
        %v912 = vsel %vm911, %v906, %v908
        %v913 = vlaneseq
        %v914 = vand.u32 %v913, 127
        %vm915 = vcmp.eq.s32.totalorder %v914, 1
        %v916 = vsel %vm915, %v904, %v912
        %v917 = vlaneseq
        %v918 = vand.u32 %v917, 127
        %vm919 = vcmp.ge.s32.totalorder %v918, 0
        %vm920 = vcmp.lt.s32.totalorder %v918, 16
        %vm921 = vmand %vm919, %vm920
        %v922 = vsel %vm921, %v916, 0.0
        %v923 = vld [vmem:[%s901] sm:$0xff]
        %924 = vrot.lane.b32.xlu0 %v923, 127
        %v925 = vpop.permute.xlu0 %924
        %v926 = vlaneseq
        %v927 = vand.u32 %v926, 127
        %vm928 = vcmp.eq.s32.totalorder %v927, 15
        %v929 = vsel %vm928, %v905, %v925
        %930 = vst [vmem:[%s868] sm:$0xff] %v890
        %931 = vst [vmem:[%s869] sm:$0xff] %v897
        %932 = vst [vmem:[%s899] sm:$0xff] %v922
        %933 = vst [vmem:[%s901] sm:$0xff] %v929
        %s934 = smov [#allocation14]
        %s935 = smov [#allocation15]
        %v936 = vld [vmem:[%s935] sm:$0xff]
        %937 = vrot.lane.b32.xlu0 %v936, 1
        %v938 = vpop.permute.xlu0 %937
        %v939 = vld [vmem:[%s934] sm:$0xff]
        %v940 = vld [vmem:[%s934] sm:$0xff]
        %941 = vrot.lane.b32.xlu0 %v940, 1
        %v942 = vpop.permute.xlu0 %941
        %v943 = vlaneseq
        %v944 = vand.u32 %v943, 127
        %vm945 = vcmp.eq.s32.totalorder %v944, 0
        %v946 = vsel %vm945, %v940, %v942
        %v947 = vlaneseq
        %v948 = vand.u32 %v947, 127
        %vm949 = vcmp.eq.s32.totalorder %v948, 1
        %v950 = vsel %vm949, %v938, %v946
        %v951 = vlaneseq
        %v952 = vand.u32 %v951, 127
        %vm953 = vcmp.ge.s32.totalorder %v952, 0
        %vm954 = vcmp.lt.s32.totalorder %v952, 16
        %vm955 = vmand %vm953, %vm954
        %v956 = vsel %vm955, %v950, 0.0
        %v957 = vld [vmem:[%s935] sm:$0xff]
        %958 = vrot.lane.b32.xlu0 %v957, 127
        %v959 = vpop.permute.xlu0 %958
        %v960 = vlaneseq
        %v961 = vand.u32 %v960, 127
        %vm962 = vcmp.eq.s32.totalorder %v961, 15
        %v963 = vsel %vm962, %v939, %v959
        %s964 = smov [#allocation14]
        %s965 = scalar_lea.vmem %s964, 8
        %s966 = smov [#allocation15]
        %s967 = scalar_lea.vmem %s966, 8
        %v968 = vld [vmem:[%s967] sm:$0xff]
        %969 = vrot.lane.b32.xlu0 %v968, 1
        %v970 = vpop.permute.xlu0 %969
        %v971 = vld [vmem:[%s965] sm:$0xff]
        %v972 = vld [vmem:[%s965] sm:$0xff]
        %973 = vrot.lane.b32.xlu0 %v972, 1
        %v974 = vpop.permute.xlu0 %973
        %v975 = vlaneseq
        %v976 = vand.u32 %v975, 127
        %vm977 = vcmp.eq.s32.totalorder %v976, 0
        %v978 = vsel %vm977, %v972, %v974
        %v979 = vlaneseq
        %v980 = vand.u32 %v979, 127
        %vm981 = vcmp.eq.s32.totalorder %v980, 1
        %v982 = vsel %vm981, %v970, %v978
        %v983 = vlaneseq
        %v984 = vand.u32 %v983, 127
        %vm985 = vcmp.ge.s32.totalorder %v984, 0
        %vm986 = vcmp.lt.s32.totalorder %v984, 16
        %vm987 = vmand %vm985, %vm986
        %v988 = vsel %vm987, %v982, 0.0
        %v989 = vld [vmem:[%s967] sm:$0xff]
        %990 = vrot.lane.b32.xlu0 %v989, 127
        %v991 = vpop.permute.xlu0 %990
        %v992 = vlaneseq
        %v993 = vand.u32 %v992, 127
        %vm994 = vcmp.eq.s32.totalorder %v993, 15
        %v995 = vsel %vm994, %v971, %v991
        %996 = vst [vmem:[%s934] sm:$0xff] %v956
        %997 = vst [vmem:[%s935] sm:$0xff] %v963
        %998 = vst [vmem:[%s965] sm:$0xff] %v988
        %999 = vst [vmem:[%s967] sm:$0xff] %v995
        %s1000 = smov [#allocation12]
        %s1001 = smov [#allocation14]
        %v1002 = vld [vmem:[%s1000] ss:$0 sm:$0xff]
        %s1004 = scalar_lea.vmem %s1000, 4294967295
        %v1005 = vld [vmem:[%s1004] sm:$0xfe]
        %v1006 = vlaneseq
        %v1007 = vshrl.u32 %v1006, 7
        %vm1008 = vcmp.eq.s32.totalorder %v1007, 0
        %v1009 = vsel %vm1008, %v1002, %v1005
        %s1010 = scalar_lea.vmem %s1000, 7
        %v1011 = vld [vmem:[%s1010] ss:$0 sm:$0xff]
        %1012 = vst [vmem:[%s1000] sm:$0xff] %v1009
        %s1013 = scalar_lea.vmem %s1000, 8
        %s1015 = scalar_lea.vmem %s1013, 4294967295
        %v1016 = vld [vmem:[%s1015] sm:$0xfe]
        %v1017 = vlaneseq
        %v1018 = vshrl.u32 %v1017, 7
        %vm1019 = vcmp.eq.s32.totalorder %v1018, 0
        %v1020 = vsel %vm1019, %v1011, %v1016
        %s1021 = scalar_lea.vmem %s1013, 7
        %v1022 = vld [vmem:[%s1021] ss:$0 sm:$0xff]
        %1023 = vst [vmem:[%s1013] sm:$0xff] %v1020
        %v1024 = vld [vmem:[%s1001] ss:$0 sm:$0xff]
        %s1025 = scalar_lea.vmem %s1000, 1
        %1026 = vst [vmem:[%s1025] sm:$0x1] %v1024
        %s1027 = scalar_lea.vmem %s1001, 8
        %s1028 = scalar_lea.vmem %s1027, 1
        %v1029 = vld [vmem:[%s1028] sm:$0x7f]
        %v1030 = vlaneseq
        %v1031 = vshrl.u32 %v1030, 7
        %vm1032 = vcmp.eq.s32.totalorder %v1031, 7
        %v1033 = vsel %vm1032, %v1022, %v1029
        %v1034 = vld [vmem:[%s1027] ss:$0 sm:$0xff]
        %1035 = vst [vmem:[%s1027] sm:$0xff] %v1033
        %s1036 = scalar_lea.vmem %s1001, 1
        %v1037 = vld [vmem:[%s1036] sm:$0x7f]
        %v1038 = vlaneseq
        %v1039 = vshrl.u32 %v1038, 7
        %vm1040 = vcmp.eq.s32.totalorder %v1039, 7
        %v1041 = vsel %vm1040, %v1034, %v1037
        %v1042 = vld [vmem:[%s1001] ss:$0 sm:$0xff]
        %1043 = vst [vmem:[%s1001] sm:$0xff] %v1041
        %s1044 = smov [#allocation13]
        %s1045 = smov [#allocation15]
        %v1046 = vld [vmem:[%s1044] ss:$0 sm:$0xff]
        %s1048 = scalar_lea.vmem %s1044, 4294967295
        %v1049 = vld [vmem:[%s1048] sm:$0xfe]
        %v1050 = vlaneseq
        %v1051 = vshrl.u32 %v1050, 7
        %vm1052 = vcmp.eq.s32.totalorder %v1051, 0
        %v1053 = vsel %vm1052, %v1046, %v1049
        %s1054 = scalar_lea.vmem %s1044, 7
        %v1055 = vld [vmem:[%s1054] ss:$0 sm:$0xff]
        %1056 = vst [vmem:[%s1044] sm:$0xff] %v1053
        %s1057 = scalar_lea.vmem %s1044, 8
        %s1059 = scalar_lea.vmem %s1057, 4294967295
        %v1060 = vld [vmem:[%s1059] sm:$0xfe]
        %v1061 = vlaneseq
        %v1062 = vshrl.u32 %v1061, 7
        %vm1063 = vcmp.eq.s32.totalorder %v1062, 0
        %v1064 = vsel %vm1063, %v1055, %v1060
        %s1065 = scalar_lea.vmem %s1057, 7
        %v1066 = vld [vmem:[%s1065] ss:$0 sm:$0xff]
        %1067 = vst [vmem:[%s1057] sm:$0xff] %v1064
        %v1068 = vld [vmem:[%s1045] ss:$0 sm:$0xff]
        %s1069 = scalar_lea.vmem %s1044, 1
        %1070 = vst [vmem:[%s1069] sm:$0x1] %v1068
        %s1071 = scalar_lea.vmem %s1045, 8
        %s1072 = scalar_lea.vmem %s1071, 1
        %v1073 = vld [vmem:[%s1072] sm:$0x7f]
        %v1074 = vlaneseq
        %v1075 = vshrl.u32 %v1074, 7
        %vm1076 = vcmp.eq.s32.totalorder %v1075, 7
        %v1077 = vsel %vm1076, %v1066, %v1073
        %v1078 = vld [vmem:[%s1071] ss:$0 sm:$0xff]
        %1079 = vst [vmem:[%s1071] sm:$0xff] %v1077
        %s1080 = scalar_lea.vmem %s1045, 1
        %v1081 = vld [vmem:[%s1080] sm:$0x7f]
        %v1082 = vlaneseq
        %v1083 = vshrl.u32 %v1082, 7
        %vm1084 = vcmp.eq.s32.totalorder %v1083, 7
        %v1085 = vsel %vm1084, %v1078, %v1081
        %v1086 = vld [vmem:[%s1045] ss:$0 sm:$0xff]
        %1087 = vst [vmem:[%s1045] sm:$0xff] %v1085
        %s1088 = smov [#allocation23]
        %v1089 = vld [vmem:[%s1088] sm:$0xff]
        %s1090 = smov [#allocation24]
        %v1091 = vld [vmem:[%s1090] sm:$0xff]
        %s1092 = smov [#allocation8]
        %s1093 = smov [#allocation9]
        %s1094 = smov [#allocation10]
        %s1095 = smov [#allocation11]
        %v1096 = vld [vmem:[%s1092] sm:$0xff]
        %v1097 = vld [vmem:[%s1093] sm:$0xff]
        %v1098 = vld [vmem:[%s1094] sm:$0xff]
        %v1099 = vld [vmem:[%s1095] sm:$0xff]
        %v1100 = vmul.f32 %v1089, %v1096
        %v1101 = vmul.f32 %v1091, %v1098
        %v1102 = vsub.f32 %v1100, %v1101
        %v1103 = vmul.f32 %v1089, %v1097
        %v1104 = vmul.f32 %v1091, %v1099
        %v1105 = vsub.f32 %v1103, %v1104
        %v1106 = vmul.f32 %v1091, %v1096
        %v1107 = vmul.f32 %v1089, %v1098
        %v1108 = vadd.f32 %v1106, %v1107
        %v1109 = vmul.f32 %v1091, %v1097
        %v1110 = vmul.f32 %v1089, %v1099
        %v1111 = vadd.f32 %v1109, %v1110
        %1112 = vst [vmem:[%s1092] sm:$0xff] %v1102
        %1113 = vst [vmem:[%s1093] sm:$0xff] %v1105
        %1114 = vst [vmem:[%s1094] sm:$0xff] %v1108
        %1115 = vst [vmem:[%s1095] sm:$0xff] %v1111
        %s1116 = smov [#allocation23]
        %s1117 = scalar_lea.vmem %s1116, 8
        %v1118 = vld [vmem:[%s1117] sm:$0xff]
        %s1119 = smov [#allocation24]
        %s1120 = scalar_lea.vmem %s1119, 8
        %v1121 = vld [vmem:[%s1120] sm:$0xff]
        %s1122 = smov [#allocation8]
        %s1123 = scalar_lea.vmem %s1122, 8
        %s1124 = smov [#allocation9]
        %s1125 = scalar_lea.vmem %s1124, 8
        %s1126 = smov [#allocation10]
        %s1127 = scalar_lea.vmem %s1126, 8
        %s1128 = smov [#allocation11]
        %s1129 = scalar_lea.vmem %s1128, 8
        %v1130 = vld [vmem:[%s1123] sm:$0xff]
        %v1131 = vld [vmem:[%s1125] sm:$0xff]
        %v1132 = vld [vmem:[%s1127] sm:$0xff]
        %v1133 = vld [vmem:[%s1129] sm:$0xff]
        %v1134 = vmul.f32 %v1118, %v1130
        %v1135 = vmul.f32 %v1121, %v1132
        %v1136 = vsub.f32 %v1134, %v1135
        %v1137 = vmul.f32 %v1118, %v1131
        %v1138 = vmul.f32 %v1121, %v1133
        %v1139 = vsub.f32 %v1137, %v1138
        %v1140 = vmul.f32 %v1121, %v1130
        %v1141 = vmul.f32 %v1118, %v1132
        %v1142 = vadd.f32 %v1140, %v1141
        %v1143 = vmul.f32 %v1121, %v1131
        %v1144 = vmul.f32 %v1118, %v1133
        %v1145 = vadd.f32 %v1143, %v1144
        %1146 = vst [vmem:[%s1123] sm:$0xff] %v1136
        %1147 = vst [vmem:[%s1125] sm:$0xff] %v1139
        %1148 = vst [vmem:[%s1127] sm:$0xff] %v1142
        %1149 = vst [vmem:[%s1129] sm:$0xff] %v1145
        %s1150 = smov [#allocation8]
        %s1151 = smov [#allocation10]
        %v1152 = vld [vmem:[%s1150] ss:$0 sm:$0xff]
        %s1154 = scalar_lea.vmem %s1150, 4294967295
        %v1155 = vld [vmem:[%s1154] sm:$0xfe]
        %v1156 = vlaneseq
        %v1157 = vshrl.u32 %v1156, 7
        %vm1158 = vcmp.eq.s32.totalorder %v1157, 0
        %v1159 = vsel %vm1158, %v1152, %v1155
        %s1160 = scalar_lea.vmem %s1150, 7
        %v1161 = vld [vmem:[%s1160] ss:$0 sm:$0xff]
        %1162 = vst [vmem:[%s1150] sm:$0xff] %v1159
        %s1163 = scalar_lea.vmem %s1150, 8
        %s1165 = scalar_lea.vmem %s1163, 4294967295
        %v1166 = vld [vmem:[%s1165] sm:$0xfe]
        %v1167 = vlaneseq
        %v1168 = vshrl.u32 %v1167, 7
        %vm1169 = vcmp.eq.s32.totalorder %v1168, 0
        %v1170 = vsel %vm1169, %v1161, %v1166
        %s1171 = scalar_lea.vmem %s1163, 7
        %v1172 = vld [vmem:[%s1171] ss:$0 sm:$0xff]
        %1173 = vst [vmem:[%s1163] sm:$0xff] %v1170
        %v1174 = vld [vmem:[%s1151] ss:$0 sm:$0xff]
        %s1175 = scalar_lea.vmem %s1150, 1
        %1176 = vst [vmem:[%s1175] sm:$0x1] %v1174
        %s1177 = scalar_lea.vmem %s1151, 8
        %s1178 = scalar_lea.vmem %s1177, 1
        %v1179 = vld [vmem:[%s1178] sm:$0x7f]
        %v1180 = vlaneseq
        %v1181 = vshrl.u32 %v1180, 7
        %vm1182 = vcmp.eq.s32.totalorder %v1181, 7
        %v1183 = vsel %vm1182, %v1172, %v1179
        %v1184 = vld [vmem:[%s1177] ss:$0 sm:$0xff]
        %1185 = vst [vmem:[%s1177] sm:$0xff] %v1183
        %s1186 = scalar_lea.vmem %s1151, 1
        %v1187 = vld [vmem:[%s1186] sm:$0x7f]
        %v1188 = vlaneseq
        %v1189 = vshrl.u32 %v1188, 7
        %vm1190 = vcmp.eq.s32.totalorder %v1189, 7
        %v1191 = vsel %vm1190, %v1184, %v1187
        %v1192 = vld [vmem:[%s1151] ss:$0 sm:$0xff]
        %1193 = vst [vmem:[%s1151] sm:$0xff] %v1191
        %s1194 = smov [#allocation9]
        %s1195 = smov [#allocation11]
        %v1196 = vld [vmem:[%s1194] ss:$0 sm:$0xff]
        %s1198 = scalar_lea.vmem %s1194, 4294967295
        %v1199 = vld [vmem:[%s1198] sm:$0xfe]
        %v1200 = vlaneseq
        %v1201 = vshrl.u32 %v1200, 7
        %vm1202 = vcmp.eq.s32.totalorder %v1201, 0
        %v1203 = vsel %vm1202, %v1196, %v1199
        %s1204 = scalar_lea.vmem %s1194, 7
        %v1205 = vld [vmem:[%s1204] ss:$0 sm:$0xff]
        %1206 = vst [vmem:[%s1194] sm:$0xff] %v1203
        %s1207 = scalar_lea.vmem %s1194, 8
        %s1209 = scalar_lea.vmem %s1207, 4294967295
        %v1210 = vld [vmem:[%s1209] sm:$0xfe]
        %v1211 = vlaneseq
        %v1212 = vshrl.u32 %v1211, 7
        %vm1213 = vcmp.eq.s32.totalorder %v1212, 0
        %v1214 = vsel %vm1213, %v1205, %v1210
        %s1215 = scalar_lea.vmem %s1207, 7
        %v1216 = vld [vmem:[%s1215] ss:$0 sm:$0xff]
        %1217 = vst [vmem:[%s1207] sm:$0xff] %v1214
        %v1218 = vld [vmem:[%s1195] ss:$0 sm:$0xff]
        %s1219 = scalar_lea.vmem %s1194, 1
        %1220 = vst [vmem:[%s1219] sm:$0x1] %v1218
        %s1221 = scalar_lea.vmem %s1195, 8
        %s1222 = scalar_lea.vmem %s1221, 1
        %v1223 = vld [vmem:[%s1222] sm:$0x7f]
        %v1224 = vlaneseq
        %v1225 = vshrl.u32 %v1224, 7
        %vm1226 = vcmp.eq.s32.totalorder %v1225, 7
        %v1227 = vsel %vm1226, %v1216, %v1223
        %v1228 = vld [vmem:[%s1221] ss:$0 sm:$0xff]
        %1229 = vst [vmem:[%s1221] sm:$0xff] %v1227
        %s1230 = scalar_lea.vmem %s1195, 1
        %v1231 = vld [vmem:[%s1230] sm:$0x7f]
        %v1232 = vlaneseq
        %v1233 = vshrl.u32 %v1232, 7
        %vm1234 = vcmp.eq.s32.totalorder %v1233, 7
        %v1235 = vsel %vm1234, %v1228, %v1231
        %v1236 = vld [vmem:[%s1195] ss:$0 sm:$0xff]
        %1237 = vst [vmem:[%s1195] sm:$0xff] %v1235
      $region101: #{custom-call.2} parent=93 // loop_footer
        %s474 = sadd.s32 1, %s470
      $region102: #{custom-call.2} parent=93 // loop_footer_branch
        %469 = sbr.rel target = $region98
      $region103: #{custom-call.2} parent=93 // loop_exit
        _
      %s1238 = sadd.s32 %s340, 1
    $region94: #{custom-call.2} parent=1 // loop_footer
      _
    $region95: #{custom-call.2} parent=1 // loop_footer_branch
      %339 = sbr.rel target = $region91
    $region96: #{custom-call.2} parent=1 // loop_exit
      _
    %s1241 = smov [#allocation12]
    %s1242 = smov [#allocation4]
    %v1243 = vlaneseq
    %v1244 = vand.u32 %v1243, 127
    %v1245 = vmov %v1244
    %v1246 = vlaneseq
    %v1247 = vshrl.u32 %v1246, 7
    %v1248 = vmov %v1247
    %v1249 = vld [vmem:[%s1241] sm:$0xff]
    %vm1252 = vcmp.eq.s32.totalorder %v1248, %v1245
    %v1253 = vsel %vm1252, %v1249, 0.0
    %s1254 = scalar_lea.vmem %s1241, 8
    %v1255 = vld [vmem:[%s1254] sm:$0xff]
    %v1257 = vadd.s32 %v1248, 8
    %vm1258 = vcmp.eq.s32.totalorder %v1257, %v1245
    %v1259 = vsel %vm1258, %v1255, %v1253
    %v1260 = vrot.slane %v1259, 4
    %v1261 = vadd.f32 %v1259, %v1260
    %v1262 = vrot.slane %v1261, 2
    %v1263 = vadd.f32 %v1261, %v1262
    %v1264 = vrot.slane %v1263, 1
    %v1265 = vadd.f32 %v1263, %v1264
    %1266 = vst [vmem:[%s1242] sm:$0x1] %v1265
    %s1267 = smov [#allocation15]
    %s1268 = smov [#allocation6]
    %v1269 = vlaneseq
    %v1270 = vand.u32 %v1269, 127
    %v1271 = vmov %v1270
    %v1272 = vlaneseq
    %v1273 = vshrl.u32 %v1272, 7
    %v1274 = vmov %v1273
    %v1275 = vld [vmem:[%s1267] sm:$0xff]
    %vm1278 = vcmp.eq.s32.totalorder %v1274, %v1271
    %v1279 = vsel %vm1278, %v1275, 0.0
    %s1280 = scalar_lea.vmem %s1267, 8
    %v1281 = vld [vmem:[%s1280] sm:$0xff]
    %v1283 = vadd.s32 %v1274, 8
    %vm1284 = vcmp.eq.s32.totalorder %v1283, %v1271
    %v1285 = vsel %vm1284, %v1281, %v1279
    %v1286 = vrot.slane %v1285, 4
    %v1287 = vadd.f32 %v1285, %v1286
    %v1288 = vrot.slane %v1287, 2
    %v1289 = vadd.f32 %v1287, %v1288
    %v1290 = vrot.slane %v1289, 1
    %v1291 = vadd.f32 %v1289, %v1290
    %1292 = vst [vmem:[%s1268] sm:$0x1] %v1291
    %s1294 = sshllo.u32 0, 1
    %v1296 = vld [vmem:[#allocation4] sm:%s1294]
    %s1297 = sshllo.u32 0, 1
    %1298 = vst [vmem:[#allocation5] sm:%s1297] %v1296
    %s1300 = sshllo.u32 0, 1
    %v1302 = vld [vmem:[#allocation6] sm:%s1300]
    %s1303 = sshllo.u32 0, 1
    %1304 = vst [vmem:[#allocation7] sm:%s1303] %v1302
    // Predicated region
    $region104: #{custom-call.2} parent=1 // pred_check
      _
    $region105: #{custom-call.2} parent=1 // pred_check_branch
      %1306 = sbr.rel (0) target = $region107
    $region106: #{custom-call.2} parent=1 // pred_region
      %p1308 = scmp.gt.s32.totalorder 1, 0
      // Predicated region
      $region108: #{custom-call.2} parent=106 // pred_check
        %p1309 = pneg %p1308
      $region109: #{custom-call.2} parent=106 // pred_check_branch
        %1311 = sbr.rel (%p1309) target = $region111
      $region110: #{custom-call.2} parent=106 // pred_region
        %s1312 = sshra.s32 1, 3
        %p1313 = scmp.gt.s32.totalorder %s1312, 0
        // Predicated region
        $region112: #{custom-call.2} parent=110 // pred_check
          %p1314 = pneg %p1313
        $region113: #{custom-call.2} parent=110 // pred_check_branch
          %1316 = sbr.rel (%p1314) target = $region115
        $region114: #{custom-call.2} parent=110 // pred_region
          %s1317 = ssub.s32 %s1312, 1
          %s1318 = smul.u32 %s1317, 128
          %s1319 = sshra.s32 %s1318, 4
          %s1320 = scalar_lea.vmem [#allocation5], %s1319
          %v1321 = vld [vmem:[#allocation5] sm:$0xff]
          // While loop
          $region116: #{custom-call.2} parent=114 // loop_pre_header
            _
          $region117: #{custom-call.2} parent=114 // loop_header
            %s1322 = sphi [#allocation5], %s1344
            %s1323 = sphi %s4, %s1345
            %v1324 = vphi %v1321, %v1346
            %s1325 = ssub.s32 %s1320, 64
            %p1326 = scmp.gt.s32.totalorder %s1322, %s1325
          $region118: #{custom-call.2} parent=114 // loop_header_branch
            %1328 = sbr.rel (%p1326) target = $region122
          $region119: #{custom-call.2} parent=114 // loop_body
            %1329 = vst [vmem:[%s1323] sm:$0xff] %v1324
            %v1330 = vld [vmem:[%s1322 + $0x8] sm:$0xff]
            %1331 = vst [vmem:[%s1323 + $0x8] sm:$0xff] %v1330
            %v1332 = vld [vmem:[%s1322 + $0x10] sm:$0xff]
            %1333 = vst [vmem:[%s1323 + $0x10] sm:$0xff] %v1332
            %v1334 = vld [vmem:[%s1322 + $0x18] sm:$0xff]
            %1335 = vst [vmem:[%s1323 + $0x18] sm:$0xff] %v1334
            %v1336 = vld [vmem:[%s1322 + $0x20] sm:$0xff]
            %1337 = vst [vmem:[%s1323 + $0x20] sm:$0xff] %v1336
            %v1338 = vld [vmem:[%s1322 + $0x28] sm:$0xff]
            %1339 = vst [vmem:[%s1323 + $0x28] sm:$0xff] %v1338
            %v1340 = vld [vmem:[%s1322 + $0x30] sm:$0xff]
            %1341 = vst [vmem:[%s1323 + $0x30] sm:$0xff] %v1340
            %v1342 = vld [vmem:[%s1322 + $0x38] sm:$0xff]
            %1343 = vst [vmem:[%s1323 + $0x38] sm:$0xff] %v1342
          $region120: #{custom-call.2} parent=114 // loop_footer
            %s1344 = scalar_lea.vmem %s1322, 64
            %s1345 = scalar_lea.vmem %s1323, 64
            %v1346 = vld [vmem:[%s1322 + $0x40] sm:$0xff]
          $region121: #{custom-call.2} parent=114 // loop_footer_branch
            %1347 = sbr.rel target = $region117
          $region122: #{custom-call.2} parent=114 // loop_exit
            _
          // While loop
          $region123: #{custom-call.2} parent=114 // loop_pre_header
            _
          $region124: #{custom-call.2} parent=114 // loop_header
            %s1348 = sphi %s1322, %s1356
            %s1349 = sphi %s1323, %s1357
            %v1350 = vphi %v1324, %v1350
            %p1351 = scmp.gt.s32.totalorder %s1348, %s1320
          $region125: #{custom-call.2} parent=114 // loop_header_branch
            %1353 = sbr.rel (%p1351) target = $region129
          $region126: #{custom-call.2} parent=114 // loop_body
            %v1354 = vld [vmem:[%s1348] sm:$0xff]
            %1355 = vst [vmem:[%s1349] sm:$0xff] %v1354
          $region127: #{custom-call.2} parent=114 // loop_footer
            %s1356 = scalar_lea.vmem %s1348, 8
            %s1357 = scalar_lea.vmem %s1349, 8
          $region128: #{custom-call.2} parent=114 // loop_footer_branch
            %1358 = sbr.rel target = $region124
          $region129: #{custom-call.2} parent=114 // loop_exit
            _
        $region115: #{custom-call.2} parent=110 // pred_fallthru
          _
        %s1359 = sand.u32 1, 7
        %s1360 = sshllo.u32 0, %s1359
        %s1361 = smul.u32 %s1312, 128
        %s1362 = sshra.s32 %s1361, 4
        %s1363 = scalar_lea.vmem %s4, %s1362
        %s1364 = smul.u32 %s1312, 128
        %s1365 = sshra.s32 %s1364, 4
        %s1366 = scalar_lea.vmem [#allocation5], %s1365
        %v1367 = vld [vmem:[%s1366] sm:%s1360]
        %1368 = vst [vmem:[%s1363] sm:%s1360] %v1367
      $region111: #{custom-call.2} parent=106 // pred_fallthru
        _
    $region107: #{custom-call.2} parent=1 // pred_fallthru
      _
    // Predicated region
    $region130: #{custom-call.2} parent=1 // pred_check
      _
    $region131: #{custom-call.2} parent=1 // pred_check_branch
      %1370 = sbr.rel (0) target = $region133
    $region132: #{custom-call.2} parent=1 // pred_region
      %p1372 = scmp.gt.s32.totalorder 1, 0
      // Predicated region
      $region134: #{custom-call.2} parent=132 // pred_check
        %p1373 = pneg %p1372
      $region135: #{custom-call.2} parent=132 // pred_check_branch
        %1375 = sbr.rel (%p1373) target = $region137
      $region136: #{custom-call.2} parent=132 // pred_region
        %s1376 = sshra.s32 1, 3
        %p1377 = scmp.gt.s32.totalorder %s1376, 0
        // Predicated region
        $region138: #{custom-call.2} parent=136 // pred_check
          %p1378 = pneg %p1377
        $region139: #{custom-call.2} parent=136 // pred_check_branch
          %1380 = sbr.rel (%p1378) target = $region141
        $region140: #{custom-call.2} parent=136 // pred_region
          %s1381 = ssub.s32 %s1376, 1
          %s1382 = smul.u32 %s1381, 128
          %s1383 = sshra.s32 %s1382, 4
          %s1384 = scalar_lea.vmem [#allocation7], %s1383
          %v1385 = vld [vmem:[#allocation7] sm:$0xff]
          // While loop
          $region142: #{custom-call.2} parent=140 // loop_pre_header
            _
          $region143: #{custom-call.2} parent=140 // loop_header
            %s1386 = sphi [#allocation7], %s1408
            %s1387 = sphi %s5, %s1409
            %v1388 = vphi %v1385, %v1410
            %s1389 = ssub.s32 %s1384, 64
            %p1390 = scmp.gt.s32.totalorder %s1386, %s1389
          $region144: #{custom-call.2} parent=140 // loop_header_branch
            %1392 = sbr.rel (%p1390) target = $region148
          $region145: #{custom-call.2} parent=140 // loop_body
            %1393 = vst [vmem:[%s1387] sm:$0xff] %v1388
            %v1394 = vld [vmem:[%s1386 + $0x8] sm:$0xff]
            %1395 = vst [vmem:[%s1387 + $0x8] sm:$0xff] %v1394
            %v1396 = vld [vmem:[%s1386 + $0x10] sm:$0xff]
            %1397 = vst [vmem:[%s1387 + $0x10] sm:$0xff] %v1396
            %v1398 = vld [vmem:[%s1386 + $0x18] sm:$0xff]
            %1399 = vst [vmem:[%s1387 + $0x18] sm:$0xff] %v1398
            %v1400 = vld [vmem:[%s1386 + $0x20] sm:$0xff]
            %1401 = vst [vmem:[%s1387 + $0x20] sm:$0xff] %v1400
            %v1402 = vld [vmem:[%s1386 + $0x28] sm:$0xff]
            %1403 = vst [vmem:[%s1387 + $0x28] sm:$0xff] %v1402
            %v1404 = vld [vmem:[%s1386 + $0x30] sm:$0xff]
            %1405 = vst [vmem:[%s1387 + $0x30] sm:$0xff] %v1404
            %v1406 = vld [vmem:[%s1386 + $0x38] sm:$0xff]
            %1407 = vst [vmem:[%s1387 + $0x38] sm:$0xff] %v1406
          $region146: #{custom-call.2} parent=140 // loop_footer
            %s1408 = scalar_lea.vmem %s1386, 64
            %s1409 = scalar_lea.vmem %s1387, 64
            %v1410 = vld [vmem:[%s1386 + $0x40] sm:$0xff]
          $region147: #{custom-call.2} parent=140 // loop_footer_branch
            %1411 = sbr.rel target = $region143
          $region148: #{custom-call.2} parent=140 // loop_exit
            _
          // While loop
          $region149: #{custom-call.2} parent=140 // loop_pre_header
            _
          $region150: #{custom-call.2} parent=140 // loop_header
            %s1412 = sphi %s1386, %s1420
            %s1413 = sphi %s1387, %s1421
            %v1414 = vphi %v1388, %v1414
            %p1415 = scmp.gt.s32.totalorder %s1412, %s1384
          $region151: #{custom-call.2} parent=140 // loop_header_branch
            %1417 = sbr.rel (%p1415) target = $region155
          $region152: #{custom-call.2} parent=140 // loop_body
            %v1418 = vld [vmem:[%s1412] sm:$0xff]
            %1419 = vst [vmem:[%s1413] sm:$0xff] %v1418
          $region153: #{custom-call.2} parent=140 // loop_footer
            %s1420 = scalar_lea.vmem %s1412, 8
            %s1421 = scalar_lea.vmem %s1413, 8
          $region154: #{custom-call.2} parent=140 // loop_footer_branch
            %1422 = sbr.rel target = $region150
          $region155: #{custom-call.2} parent=140 // loop_exit
            _
        $region141: #{custom-call.2} parent=136 // pred_fallthru
          _
        %s1423 = sand.u32 1, 7
        %s1424 = sshllo.u32 0, %s1423
        %s1425 = smul.u32 %s1376, 128
        %s1426 = sshra.s32 %s1425, 4
        %s1427 = scalar_lea.vmem %s5, %s1426
        %s1428 = smul.u32 %s1376, 128
        %s1429 = sshra.s32 %s1428, 4
        %s1430 = scalar_lea.vmem [#allocation7], %s1429
        %v1431 = vld [vmem:[%s1430] sm:%s1424]
        %1432 = vst [vmem:[%s1427] sm:%s1424] %v1431
      $region137: #{custom-call.2} parent=132 // pred_fallthru
        _
    $region133: #{custom-call.2} parent=1 // pred_fallthru
      _
    %p1434 = scmp.gt.s32.totalorder 16, 0
    // Predicated region
    $region156: #{custom-call.2} parent=1 // pred_check
      %p1435 = pneg %p1434
    $region157: #{custom-call.2} parent=1 // pred_check_branch
      %1437 = sbr.rel (%p1435) target = $region159
    $region158: #{custom-call.2} parent=1 // pred_region
      %s1438 = sshra.s32 16, 3
      %p1439 = scmp.gt.s32.totalorder %s1438, 0
      // Predicated region
      $region160: #{custom-call.2} parent=158 // pred_check
        %p1440 = pneg %p1439
      $region161: #{custom-call.2} parent=158 // pred_check_branch
        %1442 = sbr.rel (%p1440) target = $region163
      $region162: #{custom-call.2} parent=158 // pred_region
        %s1443 = ssub.s32 %s1438, 1
        %s1444 = smul.u32 %s1443, 128
        %s1445 = sshra.s32 %s1444, 4
        %s1446 = scalar_lea.vmem [#allocation8], %s1445
        %v1447 = vld [vmem:[#allocation8] sm:$0xff]
        // While loop
        $region164: #{custom-call.2} parent=162 // loop_pre_header
          _
        $region165: #{custom-call.2} parent=162 // loop_header
          %s1448 = sphi [#allocation8], %s1470
          %s1449 = sphi %s6, %s1471
          %v1450 = vphi %v1447, %v1472
          %s1451 = ssub.s32 %s1446, 64
          %p1452 = scmp.gt.s32.totalorder %s1448, %s1451
        $region166: #{custom-call.2} parent=162 // loop_header_branch
          %1454 = sbr.rel (%p1452) target = $region170
        $region167: #{custom-call.2} parent=162 // loop_body
          %1455 = vst [vmem:[%s1449] sm:$0xff] %v1450
          %v1456 = vld [vmem:[%s1448 + $0x8] sm:$0xff]
          %1457 = vst [vmem:[%s1449 + $0x8] sm:$0xff] %v1456
          %v1458 = vld [vmem:[%s1448 + $0x10] sm:$0xff]
          %1459 = vst [vmem:[%s1449 + $0x10] sm:$0xff] %v1458
          %v1460 = vld [vmem:[%s1448 + $0x18] sm:$0xff]
          %1461 = vst [vmem:[%s1449 + $0x18] sm:$0xff] %v1460
          %v1462 = vld [vmem:[%s1448 + $0x20] sm:$0xff]
          %1463 = vst [vmem:[%s1449 + $0x20] sm:$0xff] %v1462
          %v1464 = vld [vmem:[%s1448 + $0x28] sm:$0xff]
          %1465 = vst [vmem:[%s1449 + $0x28] sm:$0xff] %v1464
          %v1466 = vld [vmem:[%s1448 + $0x30] sm:$0xff]
          %1467 = vst [vmem:[%s1449 + $0x30] sm:$0xff] %v1466
          %v1468 = vld [vmem:[%s1448 + $0x38] sm:$0xff]
          %1469 = vst [vmem:[%s1449 + $0x38] sm:$0xff] %v1468
        $region168: #{custom-call.2} parent=162 // loop_footer
          %s1470 = scalar_lea.vmem %s1448, 64
          %s1471 = scalar_lea.vmem %s1449, 64
          %v1472 = vld [vmem:[%s1448 + $0x40] sm:$0xff]
        $region169: #{custom-call.2} parent=162 // loop_footer_branch
          %1473 = sbr.rel target = $region165
        $region170: #{custom-call.2} parent=162 // loop_exit
          _
        // While loop
        $region171: #{custom-call.2} parent=162 // loop_pre_header
          _
        $region172: #{custom-call.2} parent=162 // loop_header
          %s1474 = sphi %s1448, %s1482
          %s1475 = sphi %s1449, %s1483
          %v1476 = vphi %v1450, %v1476
          %p1477 = scmp.gt.s32.totalorder %s1474, %s1446
        $region173: #{custom-call.2} parent=162 // loop_header_branch
          %1479 = sbr.rel (%p1477) target = $region177
        $region174: #{custom-call.2} parent=162 // loop_body
          %v1480 = vld [vmem:[%s1474] sm:$0xff]
          %1481 = vst [vmem:[%s1475] sm:$0xff] %v1480
        $region175: #{custom-call.2} parent=162 // loop_footer
          %s1482 = scalar_lea.vmem %s1474, 8
          %s1483 = scalar_lea.vmem %s1475, 8
        $region176: #{custom-call.2} parent=162 // loop_footer_branch
          %1484 = sbr.rel target = $region172
        $region177: #{custom-call.2} parent=162 // loop_exit
          _
      $region163: #{custom-call.2} parent=158 // pred_fallthru
        _
      %s1485 = sand.u32 16, 7
      %s1486 = sshllo.u32 0, %s1485
      %s1487 = smul.u32 %s1438, 128
      %s1488 = sshra.s32 %s1487, 4
      %s1489 = scalar_lea.vmem %s6, %s1488
      %s1490 = smul.u32 %s1438, 128
      %s1491 = sshra.s32 %s1490, 4
      %s1492 = scalar_lea.vmem [#allocation8], %s1491
      %v1493 = vld [vmem:[%s1492] sm:%s1486]
      %1494 = vst [vmem:[%s1489] sm:%s1486] %v1493
    $region159: #{custom-call.2} parent=1 // pred_fallthru
      _
    %p1496 = scmp.gt.s32.totalorder 16, 0
    // Predicated region
    $region178: #{custom-call.2} parent=1 // pred_check
      %p1497 = pneg %p1496
    $region179: #{custom-call.2} parent=1 // pred_check_branch
      %1499 = sbr.rel (%p1497) target = $region181
    $region180: #{custom-call.2} parent=1 // pred_region
      %s1500 = sshra.s32 16, 3
      %p1501 = scmp.gt.s32.totalorder %s1500, 0
      // Predicated region
      $region182: #{custom-call.2} parent=180 // pred_check
        %p1502 = pneg %p1501
      $region183: #{custom-call.2} parent=180 // pred_check_branch
        %1504 = sbr.rel (%p1502) target = $region185
      $region184: #{custom-call.2} parent=180 // pred_region
        %s1505 = ssub.s32 %s1500, 1
        %s1506 = smul.u32 %s1505, 128
        %s1507 = sshra.s32 %s1506, 4
        %s1508 = scalar_lea.vmem [#allocation9], %s1507
        %v1509 = vld [vmem:[#allocation9] sm:$0xff]
        // While loop
        $region186: #{custom-call.2} parent=184 // loop_pre_header
          _
        $region187: #{custom-call.2} parent=184 // loop_header
          %s1510 = sphi [#allocation9], %s1532
          %s1511 = sphi %s7, %s1533
          %v1512 = vphi %v1509, %v1534
          %s1513 = ssub.s32 %s1508, 64
          %p1514 = scmp.gt.s32.totalorder %s1510, %s1513
        $region188: #{custom-call.2} parent=184 // loop_header_branch
          %1516 = sbr.rel (%p1514) target = $region192
        $region189: #{custom-call.2} parent=184 // loop_body
          %1517 = vst [vmem:[%s1511] sm:$0xff] %v1512
          %v1518 = vld [vmem:[%s1510 + $0x8] sm:$0xff]
          %1519 = vst [vmem:[%s1511 + $0x8] sm:$0xff] %v1518
          %v1520 = vld [vmem:[%s1510 + $0x10] sm:$0xff]
          %1521 = vst [vmem:[%s1511 + $0x10] sm:$0xff] %v1520
          %v1522 = vld [vmem:[%s1510 + $0x18] sm:$0xff]
          %1523 = vst [vmem:[%s1511 + $0x18] sm:$0xff] %v1522
          %v1524 = vld [vmem:[%s1510 + $0x20] sm:$0xff]
          %1525 = vst [vmem:[%s1511 + $0x20] sm:$0xff] %v1524
          %v1526 = vld [vmem:[%s1510 + $0x28] sm:$0xff]
          %1527 = vst [vmem:[%s1511 + $0x28] sm:$0xff] %v1526
          %v1528 = vld [vmem:[%s1510 + $0x30] sm:$0xff]
          %1529 = vst [vmem:[%s1511 + $0x30] sm:$0xff] %v1528
          %v1530 = vld [vmem:[%s1510 + $0x38] sm:$0xff]
          %1531 = vst [vmem:[%s1511 + $0x38] sm:$0xff] %v1530
        $region190: #{custom-call.2} parent=184 // loop_footer
          %s1532 = scalar_lea.vmem %s1510, 64
          %s1533 = scalar_lea.vmem %s1511, 64
          %v1534 = vld [vmem:[%s1510 + $0x40] sm:$0xff]
        $region191: #{custom-call.2} parent=184 // loop_footer_branch
          %1535 = sbr.rel target = $region187
        $region192: #{custom-call.2} parent=184 // loop_exit
          _
        // While loop
        $region193: #{custom-call.2} parent=184 // loop_pre_header
          _
        $region194: #{custom-call.2} parent=184 // loop_header
          %s1536 = sphi %s1510, %s1544
          %s1537 = sphi %s1511, %s1545
          %v1538 = vphi %v1512, %v1538
          %p1539 = scmp.gt.s32.totalorder %s1536, %s1508
        $region195: #{custom-call.2} parent=184 // loop_header_branch
          %1541 = sbr.rel (%p1539) target = $region199
        $region196: #{custom-call.2} parent=184 // loop_body
          %v1542 = vld [vmem:[%s1536] sm:$0xff]
          %1543 = vst [vmem:[%s1537] sm:$0xff] %v1542
        $region197: #{custom-call.2} parent=184 // loop_footer
          %s1544 = scalar_lea.vmem %s1536, 8
          %s1545 = scalar_lea.vmem %s1537, 8
        $region198: #{custom-call.2} parent=184 // loop_footer_branch
          %1546 = sbr.rel target = $region194
        $region199: #{custom-call.2} parent=184 // loop_exit
          _
      $region185: #{custom-call.2} parent=180 // pred_fallthru
        _
      %s1547 = sand.u32 16, 7
      %s1548 = sshllo.u32 0, %s1547
      %s1549 = smul.u32 %s1500, 128
      %s1550 = sshra.s32 %s1549, 4
      %s1551 = scalar_lea.vmem %s7, %s1550
      %s1552 = smul.u32 %s1500, 128
      %s1553 = sshra.s32 %s1552, 4
      %s1554 = scalar_lea.vmem [#allocation9], %s1553
      %v1555 = vld [vmem:[%s1554] sm:%s1548]
      %1556 = vst [vmem:[%s1551] sm:%s1548] %v1555
    $region181: #{custom-call.2} parent=1 // pred_fallthru
      _
    %p1558 = scmp.gt.s32.totalorder 16, 0
    // Predicated region
    $region200: #{custom-call.2} parent=1 // pred_check
      %p1559 = pneg %p1558
    $region201: #{custom-call.2} parent=1 // pred_check_branch
      %1561 = sbr.rel (%p1559) target = $region203
    $region202: #{custom-call.2} parent=1 // pred_region
      %s1562 = sshra.s32 16, 3
      %p1563 = scmp.gt.s32.totalorder %s1562, 0
      // Predicated region
      $region204: #{custom-call.2} parent=202 // pred_check
        %p1564 = pneg %p1563
      $region205: #{custom-call.2} parent=202 // pred_check_branch
        %1566 = sbr.rel (%p1564) target = $region207
      $region206: #{custom-call.2} parent=202 // pred_region
        %s1567 = ssub.s32 %s1562, 1
        %s1568 = smul.u32 %s1567, 128
        %s1569 = sshra.s32 %s1568, 4
        %s1570 = scalar_lea.vmem [#allocation10], %s1569
        %v1571 = vld [vmem:[#allocation10] sm:$0xff]
        // While loop
        $region208: #{custom-call.2} parent=206 // loop_pre_header
          _
        $region209: #{custom-call.2} parent=206 // loop_header
          %s1572 = sphi [#allocation10], %s1594
          %s1573 = sphi %s8, %s1595
          %v1574 = vphi %v1571, %v1596
          %s1575 = ssub.s32 %s1570, 64
          %p1576 = scmp.gt.s32.totalorder %s1572, %s1575
        $region210: #{custom-call.2} parent=206 // loop_header_branch
          %1578 = sbr.rel (%p1576) target = $region214
        $region211: #{custom-call.2} parent=206 // loop_body
          %1579 = vst [vmem:[%s1573] sm:$0xff] %v1574
          %v1580 = vld [vmem:[%s1572 + $0x8] sm:$0xff]
          %1581 = vst [vmem:[%s1573 + $0x8] sm:$0xff] %v1580
          %v1582 = vld [vmem:[%s1572 + $0x10] sm:$0xff]
          %1583 = vst [vmem:[%s1573 + $0x10] sm:$0xff] %v1582
          %v1584 = vld [vmem:[%s1572 + $0x18] sm:$0xff]
          %1585 = vst [vmem:[%s1573 + $0x18] sm:$0xff] %v1584
          %v1586 = vld [vmem:[%s1572 + $0x20] sm:$0xff]
          %1587 = vst [vmem:[%s1573 + $0x20] sm:$0xff] %v1586
          %v1588 = vld [vmem:[%s1572 + $0x28] sm:$0xff]
          %1589 = vst [vmem:[%s1573 + $0x28] sm:$0xff] %v1588
          %v1590 = vld [vmem:[%s1572 + $0x30] sm:$0xff]
          %1591 = vst [vmem:[%s1573 + $0x30] sm:$0xff] %v1590
          %v1592 = vld [vmem:[%s1572 + $0x38] sm:$0xff]
          %1593 = vst [vmem:[%s1573 + $0x38] sm:$0xff] %v1592
        $region212: #{custom-call.2} parent=206 // loop_footer
          %s1594 = scalar_lea.vmem %s1572, 64
          %s1595 = scalar_lea.vmem %s1573, 64
          %v1596 = vld [vmem:[%s1572 + $0x40] sm:$0xff]
        $region213: #{custom-call.2} parent=206 // loop_footer_branch
          %1597 = sbr.rel target = $region209
        $region214: #{custom-call.2} parent=206 // loop_exit
          _
        // While loop
        $region215: #{custom-call.2} parent=206 // loop_pre_header
          _
        $region216: #{custom-call.2} parent=206 // loop_header
          %s1598 = sphi %s1572, %s1606
          %s1599 = sphi %s1573, %s1607
          %v1600 = vphi %v1574, %v1600
          %p1601 = scmp.gt.s32.totalorder %s1598, %s1570
        $region217: #{custom-call.2} parent=206 // loop_header_branch
          %1603 = sbr.rel (%p1601) target = $region221
        $region218: #{custom-call.2} parent=206 // loop_body
          %v1604 = vld [vmem:[%s1598] sm:$0xff]
          %1605 = vst [vmem:[%s1599] sm:$0xff] %v1604
        $region219: #{custom-call.2} parent=206 // loop_footer
          %s1606 = scalar_lea.vmem %s1598, 8
          %s1607 = scalar_lea.vmem %s1599, 8
        $region220: #{custom-call.2} parent=206 // loop_footer_branch
          %1608 = sbr.rel target = $region216
        $region221: #{custom-call.2} parent=206 // loop_exit
          _
      $region207: #{custom-call.2} parent=202 // pred_fallthru
        _
      %s1609 = sand.u32 16, 7
      %s1610 = sshllo.u32 0, %s1609
      %s1611 = smul.u32 %s1562, 128
      %s1612 = sshra.s32 %s1611, 4
      %s1613 = scalar_lea.vmem %s8, %s1612
      %s1614 = smul.u32 %s1562, 128
      %s1615 = sshra.s32 %s1614, 4
      %s1616 = scalar_lea.vmem [#allocation10], %s1615
      %v1617 = vld [vmem:[%s1616] sm:%s1610]
      %1618 = vst [vmem:[%s1613] sm:%s1610] %v1617
    $region203: #{custom-call.2} parent=1 // pred_fallthru
      _
    %p1620 = scmp.gt.s32.totalorder 16, 0
    // Predicated region
    $region222: #{custom-call.2} parent=1 // pred_check
      %p1621 = pneg %p1620
    $region223: #{custom-call.2} parent=1 // pred_check_branch
      %1623 = sbr.rel (%p1621) target = $region225
    $region224: #{custom-call.2} parent=1 // pred_region
      %s1624 = sshra.s32 16, 3
      %p1625 = scmp.gt.s32.totalorder %s1624, 0
      // Predicated region
      $region226: #{custom-call.2} parent=224 // pred_check
        %p1626 = pneg %p1625
      $region227: #{custom-call.2} parent=224 // pred_check_branch
        %1628 = sbr.rel (%p1626) target = $region229
      $region228: #{custom-call.2} parent=224 // pred_region
        %s1629 = ssub.s32 %s1624, 1
        %s1630 = smul.u32 %s1629, 128
        %s1631 = sshra.s32 %s1630, 4
        %s1632 = scalar_lea.vmem [#allocation11], %s1631
        %v1633 = vld [vmem:[#allocation11] sm:$0xff]
        // While loop
        $region230: #{custom-call.2} parent=228 // loop_pre_header
          _
        $region231: #{custom-call.2} parent=228 // loop_header
          %s1634 = sphi [#allocation11], %s1656
          %s1635 = sphi %s9, %s1657
          %v1636 = vphi %v1633, %v1658
          %s1637 = ssub.s32 %s1632, 64
          %p1638 = scmp.gt.s32.totalorder %s1634, %s1637
        $region232: #{custom-call.2} parent=228 // loop_header_branch
          %1640 = sbr.rel (%p1638) target = $region236
        $region233: #{custom-call.2} parent=228 // loop_body
          %1641 = vst [vmem:[%s1635] sm:$0xff] %v1636
          %v1642 = vld [vmem:[%s1634 + $0x8] sm:$0xff]
          %1643 = vst [vmem:[%s1635 + $0x8] sm:$0xff] %v1642
          %v1644 = vld [vmem:[%s1634 + $0x10] sm:$0xff]
          %1645 = vst [vmem:[%s1635 + $0x10] sm:$0xff] %v1644
          %v1646 = vld [vmem:[%s1634 + $0x18] sm:$0xff]
          %1647 = vst [vmem:[%s1635 + $0x18] sm:$0xff] %v1646
          %v1648 = vld [vmem:[%s1634 + $0x20] sm:$0xff]
          %1649 = vst [vmem:[%s1635 + $0x20] sm:$0xff] %v1648
          %v1650 = vld [vmem:[%s1634 + $0x28] sm:$0xff]
          %1651 = vst [vmem:[%s1635 + $0x28] sm:$0xff] %v1650
          %v1652 = vld [vmem:[%s1634 + $0x30] sm:$0xff]
          %1653 = vst [vmem:[%s1635 + $0x30] sm:$0xff] %v1652
          %v1654 = vld [vmem:[%s1634 + $0x38] sm:$0xff]
          %1655 = vst [vmem:[%s1635 + $0x38] sm:$0xff] %v1654
        $region234: #{custom-call.2} parent=228 // loop_footer
          %s1656 = scalar_lea.vmem %s1634, 64
          %s1657 = scalar_lea.vmem %s1635, 64
          %v1658 = vld [vmem:[%s1634 + $0x40] sm:$0xff]
        $region235: #{custom-call.2} parent=228 // loop_footer_branch
          %1659 = sbr.rel target = $region231
        $region236: #{custom-call.2} parent=228 // loop_exit
          _
        // While loop
        $region237: #{custom-call.2} parent=228 // loop_pre_header
          _
        $region238: #{custom-call.2} parent=228 // loop_header
          %s1660 = sphi %s1634, %s1668
          %s1661 = sphi %s1635, %s1669
          %v1662 = vphi %v1636, %v1662
          %p1663 = scmp.gt.s32.totalorder %s1660, %s1632
        $region239: #{custom-call.2} parent=228 // loop_header_branch
          %1665 = sbr.rel (%p1663) target = $region243
        $region240: #{custom-call.2} parent=228 // loop_body
          %v1666 = vld [vmem:[%s1660] sm:$0xff]
          %1667 = vst [vmem:[%s1661] sm:$0xff] %v1666
        $region241: #{custom-call.2} parent=228 // loop_footer
          %s1668 = scalar_lea.vmem %s1660, 8
          %s1669 = scalar_lea.vmem %s1661, 8
        $region242: #{custom-call.2} parent=228 // loop_footer_branch
          %1670 = sbr.rel target = $region238
        $region243: #{custom-call.2} parent=228 // loop_exit
          _
      $region229: #{custom-call.2} parent=224 // pred_fallthru
        _
      %s1671 = sand.u32 16, 7
      %s1672 = sshllo.u32 0, %s1671
      %s1673 = smul.u32 %s1624, 128
      %s1674 = sshra.s32 %s1673, 4
      %s1675 = scalar_lea.vmem %s9, %s1674
      %s1676 = smul.u32 %s1624, 128
      %s1677 = sshra.s32 %s1676, 4
      %s1678 = scalar_lea.vmem [#allocation11], %s1677
      %v1679 = vld [vmem:[%s1678] sm:%s1672]
      %1680 = vst [vmem:[%s1675] sm:%s1672] %v1679
    $region225: #{custom-call.2} parent=1 // pred_fallthru
      _
    // Predicated region
    $region244: #{custom-call.2} parent=1 // pred_check
      _
    $region245: #{custom-call.2} parent=1 // pred_check_branch
      %1682 = sbr.rel (0) target = $region247
    $region246: #{custom-call.2} parent=1 // pred_region
      _
    $region247: #{custom-call.2} parent=1 // pred_fallthru
      _
    // Predicated region
    $region248: #{custom-call.2} parent=1 // pred_check
      _
    $region249: #{custom-call.2} parent=1 // pred_check_branch
      %1684 = sbr.rel (0) target = $region251
    $region250: #{custom-call.2} parent=1 // pred_region
      _
    $region251: #{custom-call.2} parent=1 // pred_fallthru
      _

// kernel: whitening.2
$region0: #{whitening.2}
  #allocation0 [shape = 'u32[]', space=smem, size = 0x4, offset = 0x4, fixed_abs, tag = 'smem constant byte address 0x4 - core index']
  #allocation1 [shape = 'u32[144,128]{1,0:T(1,128)}', space=vmem, size = 0x12000, scoped, tag = 'internal scratch']
  %s0 = inlined_call_operand.vmem [shape: f32[256,32], index: 0, kind: input, shape index: {}]
  %s1 = inlined_call_operand.vmem [shape: f32[1,32], index: 1, kind: input, shape index: {}]
  %s2 = inlined_call_operand.vmem [shape: f32[1,32], index: 2, kind: output, shape index: {0}]
  %s3 = inlined_call_operand.vmem [shape: f32[32,32], index: 3, kind: output, shape index: {1}]
  %4 = xla_tuple %s2, %s3
  %s5 = sld [smem:[#allocation0]]
  $region34: #{whitening.2} parent=0
    _
  %s7 = ssub.s32 1, %s5
  %s8 = scalar_select 0, %s7, %s5
  // Predicated region
  $region2: #{whitening.2} parent=0 // pred_check
    _
  $region3: #{whitening.2} parent=0 // pred_check_branch
    %10 = sbr.rel (0) target = $region5
  $region4: #{whitening.2} parent=0 // pred_region
    _
  $region5: #{whitening.2} parent=0 // pred_fallthru
    _
  // Predicated region
  $region6: #{whitening.2} parent=0 // pred_check
    _
  $region7: #{whitening.2} parent=0 // pred_check_branch
    %12 = sbr.rel (0) target = $region9
  $region8: #{whitening.2} parent=0 // pred_region
    _
  $region9: #{whitening.2} parent=0 // pred_fallthru
    _
  %p13 = scmp.eq.s32.totalorder 0, 0
  // Predicated region
  $region10: #{whitening.2} parent=0 // pred_check
    %p14 = pneg %p13
  $region11: #{whitening.2} parent=0 // pred_check_branch
    %16 = sbr.rel (%p14) target = $region13
  $region12: #{whitening.2} parent=0 // pred_region
    %vm17 = vcmask 253952
    %18 = vst.msk [vmem:[%s2] sm:$0x1] %vm17, 0.0
    %vm19 = vcmask 261120
    %20 = vst.msk [vmem:[%s3] sm:$0xff] %vm19, 0.0
    %21 = vst.msk [vmem:[%s3 + $0x8] sm:$0xff] %vm19, 0.0
    %22 = vst.msk [vmem:[%s3 + $0x10] sm:$0xff] %vm19, 0.0
    %23 = vst.msk [vmem:[%s3 + $0x18] sm:$0xff] %vm19, 0.0
  $region13: #{whitening.2} parent=0 // pred_fallthru
    _
  %v24 = vld [vmem:[%s1] sm:$0x1]
  %v25 = vld [vmem:[%s0] sm:$0xff]
  %v26 = vld [vmem:[%s0 + $0x8] sm:$0xff]
  %v27 = vld [vmem:[%s0 + $0x10] sm:$0xff]
  %v28 = vld [vmem:[%s0 + $0x18] sm:$0xff]
  %v29 = vld [vmem:[%s0 + $0x20] sm:$0xff]
  %v30 = vld [vmem:[%s0 + $0x28] sm:$0xff]
  %v31 = vld [vmem:[%s0 + $0x30] sm:$0xff]
  %v32 = vld [vmem:[%s0 + $0x38] sm:$0xff]
  %v33 = vld [vmem:[%s0 + $0x40] sm:$0xff]
  %v34 = vld [vmem:[%s0 + $0x48] sm:$0xff]
  %v35 = vld [vmem:[%s0 + $0x50] sm:$0xff]
  %v36 = vld [vmem:[%s0 + $0x58] sm:$0xff]
  %v37 = vld [vmem:[%s0 + $0x60] sm:$0xff]
  %v38 = vld [vmem:[%s0 + $0x68] sm:$0xff]
  %v39 = vld [vmem:[%s0 + $0x70] sm:$0xff]
  %v40 = vld [vmem:[%s0 + $0x78] sm:$0xff]
  %v41 = vld [vmem:[%s0 + $0x80] sm:$0xff]
  %v42 = vld [vmem:[%s0 + $0x88] sm:$0xff]
  %v43 = vld [vmem:[%s0 + $0x90] sm:$0xff]
  %v44 = vld [vmem:[%s0 + $0x98] sm:$0xff]
  %v45 = vld [vmem:[%s0 + $0xa0] sm:$0xff]
  %v46 = vld [vmem:[%s0 + $0xa8] sm:$0xff]
  %v47 = vld [vmem:[%s0 + $0xb0] sm:$0xff]
  %v48 = vld [vmem:[%s0 + $0xb8] sm:$0xff]
  %v49 = vld [vmem:[%s0 + $0xc0] sm:$0xff]
  %v50 = vld [vmem:[%s0 + $0xc8] sm:$0xff]
  %v51 = vld [vmem:[%s0 + $0xd0] sm:$0xff]
  %v52 = vld [vmem:[%s0 + $0xd8] sm:$0xff]
  %v53 = vld [vmem:[%s0 + $0xe0] sm:$0xff]
  %v54 = vld [vmem:[%s0 + $0xe8] sm:$0xff]
  %v55 = vld [vmem:[%s0 + $0xf0] sm:$0xff]
  %v56 = vld [vmem:[%s0 + $0xf8] sm:$0xff]
  %v58 = vlaneseq
  %v59 = vshrl.u32 %v58, 7
  %v60 = vsub.s32 0, %v59
  %v61 = vrot.slane %v24, %v60
  %v63 = vsub.f32 %v25, %v61
  %v64 = vsub.f32 %v26, %v61
  %v65 = vsub.f32 %v27, %v61
  %v66 = vsub.f32 %v28, %v61
  %v67 = vsub.f32 %v29, %v61
  %v68 = vsub.f32 %v30, %v61
  %v69 = vsub.f32 %v31, %v61
  %v70 = vsub.f32 %v32, %v61
  %v71 = vsub.f32 %v33, %v61
  %v72 = vsub.f32 %v34, %v61
  %v73 = vsub.f32 %v35, %v61
  %v74 = vsub.f32 %v36, %v61
  %v75 = vsub.f32 %v37, %v61
  %v76 = vsub.f32 %v38, %v61
  %v77 = vsub.f32 %v39, %v61
  %v78 = vsub.f32 %v40, %v61
  %v79 = vsub.f32 %v41, %v61
  %v80 = vsub.f32 %v42, %v61
  %v81 = vsub.f32 %v43, %v61
  %v82 = vsub.f32 %v44, %v61
  %v83 = vsub.f32 %v45, %v61
  %v84 = vsub.f32 %v46, %v61
  %v85 = vsub.f32 %v47, %v61
  %v86 = vsub.f32 %v48, %v61
  %v87 = vsub.f32 %v49, %v61
  %v88 = vsub.f32 %v50, %v61
  %v89 = vsub.f32 %v51, %v61
  %v90 = vsub.f32 %v52, %v61
  %v91 = vsub.f32 %v53, %v61
  %v92 = vsub.f32 %v54, %v61
  %v93 = vsub.f32 %v55, %v61
  %v94 = vsub.f32 %v56, %v61
  %v95 = vld [vmem:[%s2] sm:$0x1]
  %vm96 = vcmask 261120
  %v97 = vsel %vm96, %v63, 0.0
  %v98 = vsel %vm96, %v64, 0.0
  %v99 = vadd.f32 %v97, %v98
  %v100 = vsel %vm96, %v65, 0.0
  %v101 = vadd.f32 %v99, %v100
  %v102 = vsel %vm96, %v66, 0.0
  %v103 = vadd.f32 %v101, %v102
  %v104 = vsel %vm96, %v67, 0.0
  %v105 = vadd.f32 %v103, %v104
  %v106 = vsel %vm96, %v68, 0.0
  %v107 = vadd.f32 %v105, %v106
  %v108 = vsel %vm96, %v69, 0.0
  %v109 = vadd.f32 %v107, %v108
  %v110 = vsel %vm96, %v70, 0.0
  %v111 = vadd.f32 %v109, %v110
  %v112 = vsel %vm96, %v71, 0.0
  %v113 = vadd.f32 %v111, %v112
  %v114 = vsel %vm96, %v72, 0.0
  %v115 = vadd.f32 %v113, %v114
  %v116 = vsel %vm96, %v73, 0.0
  %v117 = vadd.f32 %v115, %v116
  %v118 = vsel %vm96, %v74, 0.0
  %v119 = vadd.f32 %v117, %v118
  %v120 = vsel %vm96, %v75, 0.0
  %v121 = vadd.f32 %v119, %v120
  %v122 = vsel %vm96, %v76, 0.0
  %v123 = vadd.f32 %v121, %v122
  %v124 = vsel %vm96, %v77, 0.0
  %v125 = vadd.f32 %v123, %v124
  %v126 = vsel %vm96, %v78, 0.0
  %v127 = vadd.f32 %v125, %v126
  %v128 = vsel %vm96, %v79, 0.0
  %v129 = vadd.f32 %v127, %v128
  %v130 = vsel %vm96, %v80, 0.0
  %v131 = vadd.f32 %v129, %v130
  %v132 = vsel %vm96, %v81, 0.0
  %v133 = vadd.f32 %v131, %v132
  %v134 = vsel %vm96, %v82, 0.0
  %v135 = vadd.f32 %v133, %v134
  %v136 = vsel %vm96, %v83, 0.0
  %v137 = vadd.f32 %v135, %v136
  %v138 = vsel %vm96, %v84, 0.0
  %v139 = vadd.f32 %v137, %v138
  %v140 = vsel %vm96, %v85, 0.0
  %v141 = vadd.f32 %v139, %v140
  %v142 = vsel %vm96, %v86, 0.0
  %v143 = vadd.f32 %v141, %v142
  %v144 = vsel %vm96, %v87, 0.0
  %v145 = vadd.f32 %v143, %v144
  %v146 = vsel %vm96, %v88, 0.0
  %v147 = vadd.f32 %v145, %v146
  %v148 = vsel %vm96, %v89, 0.0
  %v149 = vadd.f32 %v147, %v148
  %v150 = vsel %vm96, %v90, 0.0
  %v151 = vadd.f32 %v149, %v150
  %v152 = vsel %vm96, %v91, 0.0
  %v153 = vadd.f32 %v151, %v152
  %v154 = vsel %vm96, %v92, 0.0
  %v155 = vadd.f32 %v153, %v154
  %v156 = vsel %vm96, %v93, 0.0
  %v157 = vadd.f32 %v155, %v156
  %v158 = vsel %vm96, %v94, 0.0
  %v159 = vadd.f32 %v157, %v158
  %v160 = vrot.slane %v159, 4
  %v161 = vadd.f32 %v159, %v160
  %v162 = vrot.slane %v161, 2
  %v163 = vadd.f32 %v161, %v162
  %v164 = vrot.slane %v163, 1
  %v165 = vadd.f32 %v163, %v164
  %v166 = vadd.f32 %v95, %v165
  %vm167 = vcmask 253952
  %168 = vst.msk [vmem:[%s2] sm:$0x1] %vm167, %v166
  %v169 = vld [vmem:[%s3] sm:$0xff]
  %v170 = vld [vmem:[%s3 + $0x8] sm:$0xff]
  %v171 = vld [vmem:[%s3 + $0x10] sm:$0xff]
  %v172 = vld [vmem:[%s3 + $0x18] sm:$0xff]
  %173 = vxpose.xlu0.b32.start [1/16] %v63, 128
  %174 = vxpose.xlu0.b32.cont [2/16] %v64, 128
  %175 = vxpose.xlu0.b32.cont [3/16] %v65, 128
  %176 = vxpose.xlu0.b32.cont [4/16] %v66, 128
  %177 = vxpose.xlu0.b32.cont [5/16] %v67, 128
  %178 = vxpose.xlu0.b32.cont [6/16] %v68, 128
  %179 = vxpose.xlu0.b32.cont [7/16] %v69, 128
  %180 = vxpose.xlu0.b32.cont [8/16] %v70, 128
  %181 = vxpose.xlu0.b32.cont [9/16] %v71, 128
  %182 = vxpose.xlu0.b32.cont [10/16] %v72, 128
  %183 = vxpose.xlu0.b32.cont [11/16] %v73, 128
  %184 = vxpose.xlu0.b32.cont [12/16] %v74, 128
  %185 = vxpose.xlu0.b32.cont [13/16] %v75, 128
  %186 = vxpose.xlu0.b32.cont [14/16] %v76, 128
  %187 = vxpose.xlu0.b32.cont [15/16] %v77, 128
  %188 = vxpose.xlu0.b32.end [16/16] %v78, 128
  %v189 = vpop.trf.xlu0
  %v190 = vpop.trf.xlu0
  %v191 = vpop.trf.xlu0
  %v192 = vpop.trf.xlu0
  %v193 = vpop.trf.xlu0
  %v194 = vpop.trf.xlu0
  %v195 = vpop.trf.xlu0
  %v196 = vpop.trf.xlu0
  %v197 = vpop.trf.xlu0
  %v198 = vpop.trf.xlu0
  %v199 = vpop.trf.xlu0
  %v200 = vpop.trf.xlu0
  %v201 = vpop.trf.xlu0
  %v202 = vpop.trf.xlu0
  %v203 = vpop.trf.xlu0
  %v204 = vpop.trf.xlu0
  %205 = vxpose.xlu0.b32.start [1/16] %v79, 128
  %206 = vxpose.xlu0.b32.cont [2/16] %v80, 128
  %207 = vxpose.xlu0.b32.cont [3/16] %v81, 128
  %208 = vxpose.xlu0.b32.cont [4/16] %v82, 128
  %209 = vxpose.xlu0.b32.cont [5/16] %v83, 128
  %210 = vxpose.xlu0.b32.cont [6/16] %v84, 128
  %211 = vxpose.xlu0.b32.cont [7/16] %v85, 128
  %212 = vxpose.xlu0.b32.cont [8/16] %v86, 128
  %213 = vxpose.xlu0.b32.cont [9/16] %v87, 128
  %214 = vxpose.xlu0.b32.cont [10/16] %v88, 128
  %215 = vxpose.xlu0.b32.cont [11/16] %v89, 128
  %216 = vxpose.xlu0.b32.cont [12/16] %v90, 128
  %217 = vxpose.xlu0.b32.cont [13/16] %v91, 128
  %218 = vxpose.xlu0.b32.cont [14/16] %v92, 128
  %219 = vxpose.xlu0.b32.cont [15/16] %v93, 128
  %220 = vxpose.xlu0.b32.end [16/16] %v94, 128
  %v221 = vpop.trf.xlu0
  %v222 = vpop.trf.xlu0
  %v223 = vpop.trf.xlu0
  %v224 = vpop.trf.xlu0
  %v225 = vpop.trf.xlu0
  %v226 = vpop.trf.xlu0
  %v227 = vpop.trf.xlu0
  %v228 = vpop.trf.xlu0
  %v229 = vpop.trf.xlu0
  %v230 = vpop.trf.xlu0
  %v231 = vpop.trf.xlu0
  %v232 = vpop.trf.xlu0
  %v233 = vpop.trf.xlu0
  %v234 = vpop.trf.xlu0
  %v235 = vpop.trf.xlu0
  %v236 = vpop.trf.xlu0
  %237 = vmatprep.subr.mxu0 0.0
  %238 = vmatpush1.msra.mxu0 %v63
  %239 = vmatprep.subr.mxu0 0.0
  %240 = vmatpush1.msra.mxu0 %v64
  %241 = vmatprep.subr.mxu0 0.0
  %242 = vmatpush1.msra.mxu0 %v65
  %243 = vmatprep.subr.mxu0 0.0
  %244 = vmatpush1.msra.mxu0 %v66
  %245 = vmatprep.subr.mxu0 0.0
  %246 = vmatpush1.msra.mxu0 %v67
  %247 = vmatprep.subr.mxu0 0.0
  %248 = vmatpush1.msra.mxu0 %v68
  %249 = vmatprep.subr.mxu0 0.0
  %250 = vmatpush1.msra.mxu0 %v69
  %251 = vmatprep.subr.mxu0 0.0
  %252 = vmatpush1.msra.mxu0 %v70
  %253 = vmatprep.subr.mxu0 0.0
  %254 = vmatpush1.msra.mxu0 %v71
  %255 = vmatprep.subr.mxu0 0.0
  %256 = vmatpush1.msra.mxu0 %v72
  %257 = vmatprep.subr.mxu0 0.0
  %258 = vmatpush1.msra.mxu0 %v73
  %259 = vmatprep.subr.mxu0 0.0
  %260 = vmatpush1.msra.mxu0 %v74
  %261 = vmatprep.subr.mxu0 0.0
  %262 = vmatpush1.msra.mxu0 %v75
  %263 = vmatprep.subr.mxu0 0.0
  %264 = vmatpush1.msra.mxu0 %v76
  %265 = vmatprep.subr.mxu0 0.0
  %266 = vmatpush1.msra.mxu0 %v77
  %267 = vmatprep.subr.mxu0 0.0
  %268 = vmatpush1.msra.mxu0 %v78
  %269 = vmatprep.subr.mxu0 0.0
  %270 = vmatpush1.msra.mxu0 %v79
  %271 = vmatprep.subr.mxu0 0.0
  %272 = vmatpush1.msra.mxu0 %v80
  %273 = vmatprep.subr.mxu0 0.0
  %274 = vmatpush1.msra.mxu0 %v81
  %275 = vmatprep.subr.mxu0 0.0
  %276 = vmatpush1.msra.mxu0 %v82
  %277 = vmatprep.subr.mxu0 0.0
  %278 = vmatpush1.msra.mxu0 %v83
  %279 = vmatprep.subr.mxu0 0.0
  %280 = vmatpush1.msra.mxu0 %v84
  %281 = vmatprep.subr.mxu0 0.0
  %282 = vmatpush1.msra.mxu0 %v85
  %283 = vmatprep.subr.mxu0 0.0
  %284 = vmatpush1.msra.mxu0 %v86
  %285 = vmatprep.subr.mxu0 0.0
  %286 = vmatpush1.msra.mxu0 %v87
  %287 = vmatprep.subr.mxu0 0.0
  %288 = vmatpush1.msra.mxu0 %v88
  %289 = vmatprep.subr.mxu0 0.0
  %290 = vmatpush1.msra.mxu0 %v89
  %291 = vmatprep.subr.mxu0 0.0
  %292 = vmatpush1.msra.mxu0 %v90
  %293 = vmatprep.subr.mxu0 0.0
  %294 = vmatpush1.msra.mxu0 %v91
  %295 = vmatprep.subr.mxu0 0.0
  %296 = vmatpush1.msra.mxu0 %v92
  %297 = vmatprep.subr.mxu0 0.0
  %298 = vmatpush1.msra.mxu0 %v93
  %299 = vmatprep.subr.mxu0 0.0
  %300 = vmatpush1.msra.mxu0 %v94
  %301 = vmatprep.mubr.f32.mxu0 %v221
  %302 = vmatmul.mubr.f32.gmra.mrb[0].mxu0 %v189
  %v303 = vpop.f32.mrb[0].mxu0
  %v304 = vadd.f32 0.0, %v303
  %v305 = vpop.f32.mrb[0].mxu0
  %306 = vmatprep.mubr.f32.mxu0 %v222
  %307 = vmatmul.mubr.f32.gmra.mrb[0].mxu0 %v190
  %v308 = vpop.f32.mrb[0].mxu0
  %v309 = vadd.f32 0.0, %v308
  %v310 = vpop.f32.mrb[0].mxu0
  %311 = vmatprep.mubr.f32.mxu0 %v223
  %312 = vmatmul.mubr.f32.gmra.mrb[0].mxu0 %v191
  %v313 = vpop.f32.mrb[0].mxu0
  %v314 = vadd.f32 0.0, %v313
  %v315 = vpop.f32.mrb[0].mxu0
  %316 = vmatprep.mubr.f32.mxu0 %v224
  %317 = vmatmul.mubr.f32.gmra.mrb[0].mxu0 %v192
  %v318 = vpop.f32.mrb[0].mxu0
  %v319 = vadd.f32 0.0, %v318
  %v320 = vpop.f32.mrb[0].mxu0
  %321 = vdwg.mxu0
  %v322 = vadd.f32 %v169, %v304
  %v323 = vadd.f32 %v170, %v309
  %v324 = vadd.f32 %v171, %v314
  %v325 = vadd.f32 %v172, %v319
  %326 = vst.msk [vmem:[%s3] sm:$0xff] %vm96, %v322
  %327 = vst.msk [vmem:[%s3 + $0x8] sm:$0xff] %vm96, %v323
  %328 = vst.msk [vmem:[%s3 + $0x10] sm:$0xff] %vm96, %v324
  %329 = vst.msk [vmem:[%s3 + $0x18] sm:$0xff] %vm96, %v325
  // Predicated region
  $region14: #{whitening.2} parent=0 // pred_check
    %p330 = pneg %p13
  $region15: #{whitening.2} parent=0 // pred_check_branch
    %332 = sbr.rel (%p330) target = $region17
  $region16: #{whitening.2} parent=0 // pred_region
    %v333 = vld [vmem:[%s2] sm:$0x1]
    %v334 = vmul.f32 %v333, 0.00390625
    %335 = vxpose.xlu0.b32.start [1/16] %v334, 128
    %336 = vxpose.xlu0.b32.cont [2/16] 0.0, 128
    %337 = vxpose.xlu0.b32.cont [3/16] 0.0, 128
    %338 = vxpose.xlu0.b32.cont [4/16] 0.0, 128
    %339 = vxpose.xlu0.b32.cont [5/16] 0.0, 128
    %340 = vxpose.xlu0.b32.cont [6/16] 0.0, 128
    %341 = vxpose.xlu0.b32.cont [7/16] 0.0, 128
    %342 = vxpose.xlu0.b32.cont [8/16] 0.0, 128
    %343 = vxpose.xlu0.b32.cont [9/16] 0.0, 128
    %344 = vxpose.xlu0.b32.cont [10/16] 0.0, 128
    %345 = vxpose.xlu0.b32.cont [11/16] 0.0, 128
    %346 = vxpose.xlu0.b32.cont [12/16] 0.0, 128
    %347 = vxpose.xlu0.b32.cont [13/16] 0.0, 128
    %348 = vxpose.xlu0.b32.cont [14/16] 0.0, 128
    %349 = vxpose.xlu0.b32.cont [15/16] 0.0, 128
    %350 = vxpose.xlu0.b32.end [16/16] 0.0, 128
    %v351 = vpop.trf.xlu0
    %v352 = vpop.trf.xlu0
    %v353 = vpop.trf.xlu0
    %v354 = vpop.trf.xlu0
    %v355 = vpop.trf.xlu0
    %v356 = vpop.trf.xlu0
    %v357 = vpop.trf.xlu0
    %v358 = vpop.trf.xlu0
    %v359 = vpop.trf.xlu0
    %v360 = vpop.trf.xlu0
    %v361 = vpop.trf.xlu0
    %v362 = vpop.trf.xlu0
    %v363 = vpop.trf.xlu0
    %v364 = vpop.trf.xlu0
    %v365 = vpop.trf.xlu0
    %v366 = vpop.trf.xlu0
    %vm367 = vcmask 7168
    %v369 = vsel %vm367, %v351, 0
    %v372 = vsel %vm367, %v352, 0
    %v375 = vsel %vm367, %v353, 0
    %v378 = vsel %vm367, %v354, 0
    %vm380 = vcmask 1040384
    %v382 = vsel %vm380, %v334, 0
    %384 = vmatprep.subr.mxu0 0.0
    %385 = vmatpush1.msra.mxu0 %v382
    %386 = vmatprep.subr.mxu0 0.0
    %387 = vmatpush1.msra.mxu0 0.0
    %388 = vmatprep.subr.mxu0 0.0
    %389 = vmatpush1.msra.mxu0 0.0
    %390 = vmatprep.subr.mxu0 0.0
    %391 = vmatpush1.msra.mxu0 0.0
    %392 = vmatprep.subr.mxu0 0.0
    %393 = vmatpush1.msra.mxu0 0.0
    %394 = vmatprep.subr.mxu0 0.0
    %395 = vmatpush1.msra.mxu0 0.0
    %396 = vmatprep.subr.mxu0 0.0
    %397 = vmatpush1.msra.mxu0 0.0
    %398 = vmatprep.subr.mxu0 0.0
    %399 = vmatpush1.msra.mxu0 0.0
    %400 = vmatprep.subr.mxu0 0.0
    %401 = vmatpush1.msra.mxu0 0.0
    %402 = vmatprep.subr.mxu0 0.0
    %403 = vmatpush1.msra.mxu0 0.0
    %404 = vmatprep.subr.mxu0 0.0
    %405 = vmatpush1.msra.mxu0 0.0
    %406 = vmatprep.subr.mxu0 0.0
    %407 = vmatpush1.msra.mxu0 0.0
    %408 = vmatprep.subr.mxu0 0.0
    %409 = vmatpush1.msra.mxu0 0.0
    %410 = vmatprep.subr.mxu0 0.0
    %411 = vmatpush1.msra.mxu0 0.0
    %412 = vmatprep.subr.mxu0 0.0
    %413 = vmatpush1.msra.mxu0 0.0
    %414 = vmatprep.subr.mxu0 0.0
    %415 = vmatpush1.msra.mxu0 0.0
    %416 = vmatprep.subr.mxu0 0.0
    %417 = vmatpush1.msra.mxu0 0.0
    %418 = vmatprep.subr.mxu0 0.0
    %419 = vmatpush1.msra.mxu0 0.0
    %420 = vmatprep.subr.mxu0 0.0
    %421 = vmatpush1.msra.mxu0 0.0
    %422 = vmatprep.subr.mxu0 0.0
    %423 = vmatpush1.msra.mxu0 0.0
    %424 = vmatprep.subr.mxu0 0.0
    %425 = vmatpush1.msra.mxu0 0.0
    %426 = vmatprep.subr.mxu0 0.0
    %427 = vmatpush1.msra.mxu0 0.0
    %428 = vmatprep.subr.mxu0 0.0
    %429 = vmatpush1.msra.mxu0 0.0
    %430 = vmatprep.subr.mxu0 0.0
    %431 = vmatpush1.msra.mxu0 0.0
    %432 = vmatprep.subr.mxu0 0.0
    %433 = vmatpush1.msra.mxu0 0.0
    %434 = vmatprep.subr.mxu0 0.0
    %435 = vmatpush1.msra.mxu0 0.0
    %436 = vmatprep.subr.mxu0 0.0
    %437 = vmatpush1.msra.mxu0 0.0
    %438 = vmatprep.subr.mxu0 0.0
    %439 = vmatpush1.msra.mxu0 0.0
    %440 = vmatprep.subr.mxu0 0.0
    %441 = vmatpush1.msra.mxu0 0.0
    %442 = vmatprep.subr.mxu0 0.0
    %443 = vmatpush1.msra.mxu0 0.0
    %444 = vmatprep.subr.mxu0 0.0
    %445 = vmatpush1.msra.mxu0 0.0
    %446 = vmatprep.subr.mxu0 0.0
    %447 = vmatpush1.msra.mxu0 0.0
    %448 = vmatprep.mubr.f32.mxu0 0.0
    %449 = vmatmul.mubr.f32.gmra.mrb[0].mxu0 %v369
    %v450 = vpop.f32.mrb[0].mxu0
    %v451 = vadd.f32 0.0, %v450
    %v452 = vpop.f32.mrb[0].mxu0
    %453 = vmatprep.mubr.f32.mxu0 0.0
    %454 = vmatmul.mubr.f32.gmra.mrb[0].mxu0 %v372
    %v455 = vpop.f32.mrb[0].mxu0
    %v456 = vadd.f32 0.0, %v455
    %v457 = vpop.f32.mrb[0].mxu0
    %458 = vmatprep.mubr.f32.mxu0 0.0
    %459 = vmatmul.mubr.f32.gmra.mrb[0].mxu0 %v375
    %v460 = vpop.f32.mrb[0].mxu0
    %v461 = vadd.f32 0.0, %v460
    %v462 = vpop.f32.mrb[0].mxu0
    %463 = vmatprep.mubr.f32.mxu0 0.0
    %464 = vmatmul.mubr.f32.gmra.mrb[0].mxu0 %v378
    %v465 = vpop.f32.mrb[0].mxu0
    %v466 = vadd.f32 0.0, %v465
    %v467 = vpop.f32.mrb[0].mxu0
    %468 = vdwg.mxu0
    %v469 = vld [vmem:[%s3] sm:$0xff]
    %v470 = vld [vmem:[%s3 + $0x8] sm:$0xff]
    %v471 = vld [vmem:[%s3 + $0x10] sm:$0xff]
    %v472 = vld [vmem:[%s3 + $0x18] sm:$0xff]
    %v473 = vmul.f32 %v469, 0.00390625
    %v474 = vmul.f32 %v470, 0.00390625
    %v475 = vmul.f32 %v471, 0.00390625
    %v476 = vmul.f32 %v472, 0.00390625
    %v477 = vsub.f32 %v473, %v451
    %v478 = vsub.f32 %v474, %v456
    %v479 = vsub.f32 %v475, %v461
    %v480 = vsub.f32 %v476, %v466
    %481 = vst.msk [vmem:[%s3] sm:$0xff] %vm96, %v477
    %482 = vst.msk [vmem:[%s3 + $0x8] sm:$0xff] %vm96, %v478
    %483 = vst.msk [vmem:[%s3 + $0x10] sm:$0xff] %vm96, %v479
    %484 = vst.msk [vmem:[%s3 + $0x18] sm:$0xff] %vm96, %v480
    %v485 = vadd.f32 %v334, %v24
    %486 = vst.msk [vmem:[%s2] sm:$0x1] %vm167, %v485
  $region17: #{whitening.2} parent=0 // pred_fallthru
    _
  // Predicated region
  $region18: #{whitening.2} parent=0 // pred_check
    _
  $region19: #{whitening.2} parent=0 // pred_check_branch
    %488 = sbr.rel (0) target = $region21
  $region20: #{whitening.2} parent=0 // pred_region
    _
  $region21: #{whitening.2} parent=0 // pred_fallthru
    _
  // Predicated region
  $region22: #{whitening.2} parent=0 // pred_check
    _
  $region23: #{whitening.2} parent=0 // pred_check_branch
    %490 = sbr.rel (0) target = $region25
  $region24: #{whitening.2} parent=0 // pred_region
    _
  $region25: #{whitening.2} parent=0 // pred_fallthru
    _
  // Predicated region
  $region26: #{whitening.2} parent=0 // pred_check
    _
  $region27: #{whitening.2} parent=0 // pred_check_branch
    %492 = sbr.rel (0) target = $region29
  $region28: #{whitening.2} parent=0 // pred_region
    _
  $region29: #{whitening.2} parent=0 // pred_fallthru
    _
  // Predicated region
  $region30: #{whitening.2} parent=0 // pred_check
    _
  $region31: #{whitening.2} parent=0 // pred_check_branch
    %494 = sbr.rel (0) target = $region33
  $region32: #{whitening.2} parent=0 // pred_region
    _
  $region33: #{whitening.2} parent=0 // pred_fallthru
    _

// kernel: whitening.3
$region0: #{whitening.3}
  #allocation0 [shape = 'u32[]', space=smem, size = 0x4, offset = 0x4, fixed_abs, tag = 'smem constant byte address 0x4 - core index']
  #allocation1 [shape = 'u32[144,128]{1,0:T(1,128)}', space=vmem, size = 0x12000, scoped, tag = 'internal scratch']
  %s0 = inlined_call_operand.vmem [shape: f32[256,32], index: 0, kind: input, shape index: {}]
  %s1 = inlined_call_operand.vmem [shape: f32[1,32], index: 1, kind: input, shape index: {}]
  %s2 = inlined_call_operand.vmem [shape: f32[32,32], index: 2, kind: input, shape index: {}]
  %s3 = inlined_call_operand.vmem [shape: f32[256,32], index: 3, kind: output, shape index: {}]
  %s4 = sld [smem:[#allocation0]]
  $region22: #{whitening.3} parent=0
    _
  %s6 = ssub.s32 1, %s4
  %s7 = scalar_select 0, %s6, %s4
  // Predicated region
  $region2: #{whitening.3} parent=0 // pred_check
    _
  $region3: #{whitening.3} parent=0 // pred_check_branch
    %9 = sbr.rel (0) target = $region5
  $region4: #{whitening.3} parent=0 // pred_region
    _
  $region5: #{whitening.3} parent=0 // pred_fallthru
    _
  // Predicated region
  $region6: #{whitening.3} parent=0 // pred_check
    _
  $region7: #{whitening.3} parent=0 // pred_check_branch
    %11 = sbr.rel (0) target = $region9
  $region8: #{whitening.3} parent=0 // pred_region
    _
  $region9: #{whitening.3} parent=0 // pred_fallthru
    _
  // Predicated region
  $region10: #{whitening.3} parent=0 // pred_check
    _
  $region11: #{whitening.3} parent=0 // pred_check_branch
    %13 = sbr.rel (0) target = $region13
  $region12: #{whitening.3} parent=0 // pred_region
    _
  $region13: #{whitening.3} parent=0 // pred_fallthru
    _
  %v14 = vld [vmem:[%s0] sm:$0xff]
  %v15 = vld [vmem:[%s0 + $0x8] sm:$0xff]
  %v16 = vld [vmem:[%s0 + $0x10] sm:$0xff]
  %v17 = vld [vmem:[%s0 + $0x18] sm:$0xff]
  %v18 = vld [vmem:[%s0 + $0x20] sm:$0xff]
  %v19 = vld [vmem:[%s0 + $0x28] sm:$0xff]
  %v20 = vld [vmem:[%s0 + $0x30] sm:$0xff]
  %v21 = vld [vmem:[%s0 + $0x38] sm:$0xff]
  %v22 = vld [vmem:[%s0 + $0x40] sm:$0xff]
  %v23 = vld [vmem:[%s0 + $0x48] sm:$0xff]
  %v24 = vld [vmem:[%s0 + $0x50] sm:$0xff]
  %v25 = vld [vmem:[%s0 + $0x58] sm:$0xff]
  %v26 = vld [vmem:[%s0 + $0x60] sm:$0xff]
  %v27 = vld [vmem:[%s0 + $0x68] sm:$0xff]
  %v28 = vld [vmem:[%s0 + $0x70] sm:$0xff]
  %v29 = vld [vmem:[%s0 + $0x78] sm:$0xff]
  %v30 = vld [vmem:[%s0 + $0x80] sm:$0xff]
  %v31 = vld [vmem:[%s0 + $0x88] sm:$0xff]
  %v32 = vld [vmem:[%s0 + $0x90] sm:$0xff]
  %v33 = vld [vmem:[%s0 + $0x98] sm:$0xff]
  %v34 = vld [vmem:[%s0 + $0xa0] sm:$0xff]
  %v35 = vld [vmem:[%s0 + $0xa8] sm:$0xff]
  %v36 = vld [vmem:[%s0 + $0xb0] sm:$0xff]
  %v37 = vld [vmem:[%s0 + $0xb8] sm:$0xff]
  %v38 = vld [vmem:[%s0 + $0xc0] sm:$0xff]
  %v39 = vld [vmem:[%s0 + $0xc8] sm:$0xff]
  %v40 = vld [vmem:[%s0 + $0xd0] sm:$0xff]
  %v41 = vld [vmem:[%s0 + $0xd8] sm:$0xff]
  %v42 = vld [vmem:[%s0 + $0xe0] sm:$0xff]
  %v43 = vld [vmem:[%s0 + $0xe8] sm:$0xff]
  %v44 = vld [vmem:[%s0 + $0xf0] sm:$0xff]
  %v45 = vld [vmem:[%s0 + $0xf8] sm:$0xff]
  %v46 = vld [vmem:[%s1] sm:$0x1]
  %v48 = vlaneseq
  %v49 = vshrl.u32 %v48, 7
  %v50 = vsub.s32 0, %v49
  %v51 = vrot.slane %v46, %v50
  %v53 = vsub.f32 %v14, %v51
  %v54 = vsub.f32 %v15, %v51
  %v55 = vsub.f32 %v16, %v51
  %v56 = vsub.f32 %v17, %v51
  %v57 = vsub.f32 %v18, %v51
  %v58 = vsub.f32 %v19, %v51
  %v59 = vsub.f32 %v20, %v51
  %v60 = vsub.f32 %v21, %v51
  %v61 = vsub.f32 %v22, %v51
  %v62 = vsub.f32 %v23, %v51
  %v63 = vsub.f32 %v24, %v51
  %v64 = vsub.f32 %v25, %v51
  %v65 = vsub.f32 %v26, %v51
  %v66 = vsub.f32 %v27, %v51
  %v67 = vsub.f32 %v28, %v51
  %v68 = vsub.f32 %v29, %v51
  %v69 = vsub.f32 %v30, %v51
  %v70 = vsub.f32 %v31, %v51
  %v71 = vsub.f32 %v32, %v51
  %v72 = vsub.f32 %v33, %v51
  %v73 = vsub.f32 %v34, %v51
  %v74 = vsub.f32 %v35, %v51
  %v75 = vsub.f32 %v36, %v51
  %v76 = vsub.f32 %v37, %v51
  %v77 = vsub.f32 %v38, %v51
  %v78 = vsub.f32 %v39, %v51
  %v79 = vsub.f32 %v40, %v51
  %v80 = vsub.f32 %v41, %v51
  %v81 = vsub.f32 %v42, %v51
  %v82 = vsub.f32 %v43, %v51
  %v83 = vsub.f32 %v44, %v51
  %v84 = vsub.f32 %v45, %v51
  %v85 = vld [vmem:[%s2] sm:$0xff]
  %v86 = vld [vmem:[%s2 + $0x8] sm:$0xff]
  %v87 = vld [vmem:[%s2 + $0x10] sm:$0xff]
  %v88 = vld [vmem:[%s2 + $0x18] sm:$0xff]
  %vm89 = vcmask 261120
  %v91 = vsel %vm89, %v53, 0
  %v94 = vsel %vm89, %v54, 0
  %v97 = vsel %vm89, %v55, 0
  %v100 = vsel %vm89, %v56, 0
  %v103 = vsel %vm89, %v57, 0
  %v106 = vsel %vm89, %v58, 0
  %v109 = vsel %vm89, %v59, 0
  %v112 = vsel %vm89, %v60, 0
  %v115 = vsel %vm89, %v61, 0
  %v118 = vsel %vm89, %v62, 0
  %v121 = vsel %vm89, %v63, 0
  %v124 = vsel %vm89, %v64, 0
  %v127 = vsel %vm89, %v65, 0
  %v130 = vsel %vm89, %v66, 0
  %v133 = vsel %vm89, %v67, 0
  %v136 = vsel %vm89, %v68, 0
  %v139 = vsel %vm89, %v69, 0
  %v142 = vsel %vm89, %v70, 0
  %v145 = vsel %vm89, %v71, 0
  %v148 = vsel %vm89, %v72, 0
  %v151 = vsel %vm89, %v73, 0
  %v154 = vsel %vm89, %v74, 0
  %v157 = vsel %vm89, %v75, 0
  %v160 = vsel %vm89, %v76, 0
  %v163 = vsel %vm89, %v77, 0
  %v166 = vsel %vm89, %v78, 0
  %v169 = vsel %vm89, %v79, 0
  %v172 = vsel %vm89, %v80, 0
  %v175 = vsel %vm89, %v81, 0
  %v178 = vsel %vm89, %v82, 0
  %v181 = vsel %vm89, %v83, 0
  %v184 = vsel %vm89, %v84, 0
  %186 = vmatprep.subr.mxu0 0.0
  %187 = vmatpush1.msra.mxu0 %v85
  %188 = vmatprep.subr.mxu0 0.0
  %189 = vmatpush1.msra.mxu0 %v86
  %190 = vmatprep.subr.mxu0 0.0
  %191 = vmatpush1.msra.mxu0 %v87
  %192 = vmatprep.subr.mxu0 0.0
  %193 = vmatpush1.msra.mxu0 %v88
  %194 = vmatprep.subr.mxu0 0.0
  %195 = vmatpush1.msra.mxu0 0.0
  %196 = vmatprep.subr.mxu0 0.0
  %197 = vmatpush1.msra.mxu0 0.0
  %198 = vmatprep.subr.mxu0 0.0
  %199 = vmatpush1.msra.mxu0 0.0
  %200 = vmatprep.subr.mxu0 0.0
  %201 = vmatpush1.msra.mxu0 0.0
  %202 = vmatprep.subr.mxu0 0.0
  %203 = vmatpush1.msra.mxu0 0.0
  %204 = vmatprep.subr.mxu0 0.0
  %205 = vmatpush1.msra.mxu0 0.0
  %206 = vmatprep.subr.mxu0 0.0
  %207 = vmatpush1.msra.mxu0 0.0
  %208 = vmatprep.subr.mxu0 0.0
  %209 = vmatpush1.msra.mxu0 0.0
  %210 = vmatprep.subr.mxu0 0.0
  %211 = vmatpush1.msra.mxu0 0.0
  %212 = vmatprep.subr.mxu0 0.0
  %213 = vmatpush1.msra.mxu0 0.0
  %214 = vmatprep.subr.mxu0 0.0
  %215 = vmatpush1.msra.mxu0 0.0
  %216 = vmatprep.subr.mxu0 0.0
  %217 = vmatpush1.msra.mxu0 0.0
  %218 = vmatprep.subr.mxu0 0.0
  %219 = vmatpush1.msra.mxu0 0.0
  %220 = vmatprep.subr.mxu0 0.0
  %221 = vmatpush1.msra.mxu0 0.0
  %222 = vmatprep.subr.mxu0 0.0
  %223 = vmatpush1.msra.mxu0 0.0
  %224 = vmatprep.subr.mxu0 0.0
  %225 = vmatpush1.msra.mxu0 0.0
  %226 = vmatprep.subr.mxu0 0.0
  %227 = vmatpush1.msra.mxu0 0.0
  %228 = vmatprep.subr.mxu0 0.0
  %229 = vmatpush1.msra.mxu0 0.0
  %230 = vmatprep.subr.mxu0 0.0
  %231 = vmatpush1.msra.mxu0 0.0
  %232 = vmatprep.subr.mxu0 0.0
  %233 = vmatpush1.msra.mxu0 0.0
  %234 = vmatprep.subr.mxu0 0.0
  %235 = vmatpush1.msra.mxu0 0.0
  %236 = vmatprep.subr.mxu0 0.0
  %237 = vmatpush1.msra.mxu0 0.0
  %238 = vmatprep.subr.mxu0 0.0
  %239 = vmatpush1.msra.mxu0 0.0
  %240 = vmatprep.subr.mxu0 0.0
  %241 = vmatpush1.msra.mxu0 0.0
  %242 = vmatprep.subr.mxu0 0.0
  %243 = vmatpush1.msra.mxu0 0.0
  %244 = vmatprep.subr.mxu0 0.0
  %245 = vmatpush1.msra.mxu0 0.0
  %246 = vmatprep.subr.mxu0 0.0
  %247 = vmatpush1.msra.mxu0 0.0
  %248 = vmatprep.subr.mxu0 0.0
  %249 = vmatpush1.msra.mxu0 0.0
  %250 = vmatprep.mubr.f32.mxu0 0.0
  %251 = vmatmul.mubr.f32.gmra.mrb[0].mxu0 %v91
  %v252 = vpop.f32.mrb[0].mxu0
  %v253 = vadd.f32 0.0, %v252
  %v254 = vpop.f32.mrb[0].mxu0
  %255 = vmatprep.mubr.f32.mxu0 0.0
  %256 = vmatmul.mubr.f32.gmra.mrb[0].mxu0 %v94
  %v257 = vpop.f32.mrb[0].mxu0
  %v258 = vadd.f32 0.0, %v257
  %v259 = vpop.f32.mrb[0].mxu0
  %260 = vmatprep.mubr.f32.mxu0 0.0
  %261 = vmatmul.mubr.f32.gmra.mrb[0].mxu0 %v97
  %v262 = vpop.f32.mrb[0].mxu0
  %v263 = vadd.f32 0.0, %v262
  %v264 = vpop.f32.mrb[0].mxu0
  %265 = vmatprep.mubr.f32.mxu0 0.0
  %266 = vmatmul.mubr.f32.gmra.mrb[0].mxu0 %v100
  %v267 = vpop.f32.mrb[0].mxu0
  %v268 = vadd.f32 0.0, %v267
  %v269 = vpop.f32.mrb[0].mxu0
  %270 = vmatprep.mubr.f32.mxu0 0.0
  %271 = vmatmul.mubr.f32.gmra.mrb[0].mxu0 %v103
  %v272 = vpop.f32.mrb[0].mxu0
  %v273 = vadd.f32 0.0, %v272
  %v274 = vpop.f32.mrb[0].mxu0
  %275 = vmatprep.mubr.f32.mxu0 0.0
  %276 = vmatmul.mubr.f32.gmra.mrb[0].mxu0 %v106
  %v277 = vpop.f32.mrb[0].mxu0
  %v278 = vadd.f32 0.0, %v277
  %v279 = vpop.f32.mrb[0].mxu0
  %280 = vmatprep.mubr.f32.mxu0 0.0
  %281 = vmatmul.mubr.f32.gmra.mrb[0].mxu0 %v109
  %v282 = vpop.f32.mrb[0].mxu0
  %v283 = vadd.f32 0.0, %v282
  %v284 = vpop.f32.mrb[0].mxu0
  %285 = vmatprep.mubr.f32.mxu0 0.0
  %286 = vmatmul.mubr.f32.gmra.mrb[0].mxu0 %v112
  %v287 = vpop.f32.mrb[0].mxu0
  %v288 = vadd.f32 0.0, %v287
  %v289 = vpop.f32.mrb[0].mxu0
  %290 = vmatprep.mubr.f32.mxu0 0.0
  %291 = vmatmul.mubr.f32.gmra.mrb[0].mxu0 %v115
  %v292 = vpop.f32.mrb[0].mxu0
  %v293 = vadd.f32 0.0, %v292
  %v294 = vpop.f32.mrb[0].mxu0
  %295 = vmatprep.mubr.f32.mxu0 0.0
  %296 = vmatmul.mubr.f32.gmra.mrb[0].mxu0 %v118
  %v297 = vpop.f32.mrb[0].mxu0
  %v298 = vadd.f32 0.0, %v297
  %v299 = vpop.f32.mrb[0].mxu0
  %300 = vmatprep.mubr.f32.mxu0 0.0
  %301 = vmatmul.mubr.f32.gmra.mrb[0].mxu0 %v121
  %v302 = vpop.f32.mrb[0].mxu0
  %v303 = vadd.f32 0.0, %v302
  %v304 = vpop.f32.mrb[0].mxu0
  %305 = vmatprep.mubr.f32.mxu0 0.0
  %306 = vmatmul.mubr.f32.gmra.mrb[0].mxu0 %v124
  %v307 = vpop.f32.mrb[0].mxu0
  %v308 = vadd.f32 0.0, %v307
  %v309 = vpop.f32.mrb[0].mxu0
  %310 = vmatprep.mubr.f32.mxu0 0.0
  %311 = vmatmul.mubr.f32.gmra.mrb[0].mxu0 %v127
  %v312 = vpop.f32.mrb[0].mxu0
  %v313 = vadd.f32 0.0, %v312
  %v314 = vpop.f32.mrb[0].mxu0
  %315 = vmatprep.mubr.f32.mxu0 0.0
  %316 = vmatmul.mubr.f32.gmra.mrb[0].mxu0 %v130
  %v317 = vpop.f32.mrb[0].mxu0
  %v318 = vadd.f32 0.0, %v317
  %v319 = vpop.f32.mrb[0].mxu0
  %320 = vmatprep.mubr.f32.mxu0 0.0
  %321 = vmatmul.mubr.f32.gmra.mrb[0].mxu0 %v133
  %v322 = vpop.f32.mrb[0].mxu0
  %v323 = vadd.f32 0.0, %v322
  %v324 = vpop.f32.mrb[0].mxu0
  %325 = vmatprep.mubr.f32.mxu0 0.0
  %326 = vmatmul.mubr.f32.gmra.mrb[0].mxu0 %v136
  %v327 = vpop.f32.mrb[0].mxu0
  %v328 = vadd.f32 0.0, %v327
  %v329 = vpop.f32.mrb[0].mxu0
  %330 = vmatprep.mubr.f32.mxu0 0.0
  %331 = vmatmul.mubr.f32.gmra.mrb[0].mxu0 %v139
  %v332 = vpop.f32.mrb[0].mxu0
  %v333 = vadd.f32 0.0, %v332
  %v334 = vpop.f32.mrb[0].mxu0
  %335 = vmatprep.mubr.f32.mxu0 0.0
  %336 = vmatmul.mubr.f32.gmra.mrb[0].mxu0 %v142
  %v337 = vpop.f32.mrb[0].mxu0
  %v338 = vadd.f32 0.0, %v337
  %v339 = vpop.f32.mrb[0].mxu0
  %340 = vmatprep.mubr.f32.mxu0 0.0
  %341 = vmatmul.mubr.f32.gmra.mrb[0].mxu0 %v145
  %v342 = vpop.f32.mrb[0].mxu0
  %v343 = vadd.f32 0.0, %v342
  %v344 = vpop.f32.mrb[0].mxu0
  %345 = vmatprep.mubr.f32.mxu0 0.0
  %346 = vmatmul.mubr.f32.gmra.mrb[0].mxu0 %v148
  %v347 = vpop.f32.mrb[0].mxu0
  %v348 = vadd.f32 0.0, %v347
  %v349 = vpop.f32.mrb[0].mxu0
  %350 = vmatprep.mubr.f32.mxu0 0.0
  %351 = vmatmul.mubr.f32.gmra.mrb[0].mxu0 %v151
  %v352 = vpop.f32.mrb[0].mxu0
  %v353 = vadd.f32 0.0, %v352
  %v354 = vpop.f32.mrb[0].mxu0
  %355 = vmatprep.mubr.f32.mxu0 0.0
  %356 = vmatmul.mubr.f32.gmra.mrb[0].mxu0 %v154
  %v357 = vpop.f32.mrb[0].mxu0
  %v358 = vadd.f32 0.0, %v357
  %v359 = vpop.f32.mrb[0].mxu0
  %360 = vmatprep.mubr.f32.mxu0 0.0
  %361 = vmatmul.mubr.f32.gmra.mrb[0].mxu0 %v157
  %v362 = vpop.f32.mrb[0].mxu0
  %v363 = vadd.f32 0.0, %v362
  %v364 = vpop.f32.mrb[0].mxu0
  %365 = vmatprep.mubr.f32.mxu0 0.0
  %366 = vmatmul.mubr.f32.gmra.mrb[0].mxu0 %v160
  %v367 = vpop.f32.mrb[0].mxu0
  %v368 = vadd.f32 0.0, %v367
  %v369 = vpop.f32.mrb[0].mxu0
  %370 = vmatprep.mubr.f32.mxu0 0.0
  %371 = vmatmul.mubr.f32.gmra.mrb[0].mxu0 %v163
  %v372 = vpop.f32.mrb[0].mxu0
  %v373 = vadd.f32 0.0, %v372
  %v374 = vpop.f32.mrb[0].mxu0
  %375 = vmatprep.mubr.f32.mxu0 0.0
  %376 = vmatmul.mubr.f32.gmra.mrb[0].mxu0 %v166
  %v377 = vpop.f32.mrb[0].mxu0
  %v378 = vadd.f32 0.0, %v377
  %v379 = vpop.f32.mrb[0].mxu0
  %380 = vmatprep.mubr.f32.mxu0 0.0
  %381 = vmatmul.mubr.f32.gmra.mrb[0].mxu0 %v169
  %v382 = vpop.f32.mrb[0].mxu0
  %v383 = vadd.f32 0.0, %v382
  %v384 = vpop.f32.mrb[0].mxu0
  %385 = vmatprep.mubr.f32.mxu0 0.0
  %386 = vmatmul.mubr.f32.gmra.mrb[0].mxu0 %v172
  %v387 = vpop.f32.mrb[0].mxu0
  %v388 = vadd.f32 0.0, %v387
  %v389 = vpop.f32.mrb[0].mxu0
  %390 = vmatprep.mubr.f32.mxu0 0.0
  %391 = vmatmul.mubr.f32.gmra.mrb[0].mxu0 %v175
  %v392 = vpop.f32.mrb[0].mxu0
  %v393 = vadd.f32 0.0, %v392
  %v394 = vpop.f32.mrb[0].mxu0
  %395 = vmatprep.mubr.f32.mxu0 0.0
  %396 = vmatmul.mubr.f32.gmra.mrb[0].mxu0 %v178
  %v397 = vpop.f32.mrb[0].mxu0
  %v398 = vadd.f32 0.0, %v397
  %v399 = vpop.f32.mrb[0].mxu0
  %400 = vmatprep.mubr.f32.mxu0 0.0
  %401 = vmatmul.mubr.f32.gmra.mrb[0].mxu0 %v181
  %v402 = vpop.f32.mrb[0].mxu0
  %v403 = vadd.f32 0.0, %v402
  %v404 = vpop.f32.mrb[0].mxu0
  %405 = vmatprep.mubr.f32.mxu0 0.0
  %406 = vmatmul.mubr.f32.gmra.mrb[0].mxu0 %v184
  %v407 = vpop.f32.mrb[0].mxu0
  %v408 = vadd.f32 0.0, %v407
  %v409 = vpop.f32.mrb[0].mxu0
  %410 = vdwg.mxu0
  %411 = vst.msk [vmem:[%s3] sm:$0xff] %vm89, %v253
  %412 = vst.msk [vmem:[%s3 + $0x8] sm:$0xff] %vm89, %v258
  %413 = vst.msk [vmem:[%s3 + $0x10] sm:$0xff] %vm89, %v263
  %414 = vst.msk [vmem:[%s3 + $0x18] sm:$0xff] %vm89, %v268
  %415 = vst.msk [vmem:[%s3 + $0x20] sm:$0xff] %vm89, %v273
  %416 = vst.msk [vmem:[%s3 + $0x28] sm:$0xff] %vm89, %v278
  %417 = vst.msk [vmem:[%s3 + $0x30] sm:$0xff] %vm89, %v283
  %418 = vst.msk [vmem:[%s3 + $0x38] sm:$0xff] %vm89, %v288
  %419 = vst.msk [vmem:[%s3 + $0x40] sm:$0xff] %vm89, %v293
  %420 = vst.msk [vmem:[%s3 + $0x48] sm:$0xff] %vm89, %v298
  %421 = vst.msk [vmem:[%s3 + $0x50] sm:$0xff] %vm89, %v303
  %422 = vst.msk [vmem:[%s3 + $0x58] sm:$0xff] %vm89, %v308
  %423 = vst.msk [vmem:[%s3 + $0x60] sm:$0xff] %vm89, %v313
  %424 = vst.msk [vmem:[%s3 + $0x68] sm:$0xff] %vm89, %v318
  %425 = vst.msk [vmem:[%s3 + $0x70] sm:$0xff] %vm89, %v323
  %426 = vst.msk [vmem:[%s3 + $0x78] sm:$0xff] %vm89, %v328
  %427 = vst.msk [vmem:[%s3 + $0x80] sm:$0xff] %vm89, %v333
  %428 = vst.msk [vmem:[%s3 + $0x88] sm:$0xff] %vm89, %v338
  %429 = vst.msk [vmem:[%s3 + $0x90] sm:$0xff] %vm89, %v343
  %430 = vst.msk [vmem:[%s3 + $0x98] sm:$0xff] %vm89, %v348
  %431 = vst.msk [vmem:[%s3 + $0xa0] sm:$0xff] %vm89, %v353
  %432 = vst.msk [vmem:[%s3 + $0xa8] sm:$0xff] %vm89, %v358
  %433 = vst.msk [vmem:[%s3 + $0xb0] sm:$0xff] %vm89, %v363
  %434 = vst.msk [vmem:[%s3 + $0xb8] sm:$0xff] %vm89, %v368
  %435 = vst.msk [vmem:[%s3 + $0xc0] sm:$0xff] %vm89, %v373
  %436 = vst.msk [vmem:[%s3 + $0xc8] sm:$0xff] %vm89, %v378
  %437 = vst.msk [vmem:[%s3 + $0xd0] sm:$0xff] %vm89, %v383
  %438 = vst.msk [vmem:[%s3 + $0xd8] sm:$0xff] %vm89, %v388
  %439 = vst.msk [vmem:[%s3 + $0xe0] sm:$0xff] %vm89, %v393
  %440 = vst.msk [vmem:[%s3 + $0xe8] sm:$0xff] %vm89, %v398
  %441 = vst.msk [vmem:[%s3 + $0xf0] sm:$0xff] %vm89, %v403
  %442 = vst.msk [vmem:[%s3 + $0xf8] sm:$0xff] %vm89, %v408
  // Predicated region
  $region14: #{whitening.3} parent=0 // pred_check
    _
  $region15: #{whitening.3} parent=0 // pred_check_branch
    %444 = sbr.rel (0) target = $region17
  $region16: #{whitening.3} parent=0 // pred_region
    _
  $region17: #{whitening.3} parent=0 // pred_fallthru
    _
  // Predicated region
  $region18: #{whitening.3} parent=0 // pred_check
    _
  $region19: #{whitening.3} parent=0 // pred_check_branch
    %446 = sbr.rel (0) target = $region21
  $region20: #{whitening.3} parent=0 // pred_region
    _
  $region21: #{whitening.3} parent=0 // pred_fallthru
    _

</llo_original>
